<compile_context>
chip_gen: v7x
topology: tpu7x:2x2x1
jax: 0.10.0
libtpu: 0.0.40
codegen_flags: <defaults>
</compile_context>

<pallas_src>
import math
from functools import partial

import numpy as np
import jax
import jax.numpy as jnp
from jax import lax
from jax.experimental import pallas as pl
from jax.experimental.pallas import tpu as pltpu

# ----- stand-ins for the original `hp` hyperparameters (small, lane-dense) -----
DECODER_HEAD = 2            # hp.decoder_head
ENCODER_OUTPUT_SIZE = 128   # hp.encoder_output_size (d_model), multiple of 128
D_K = 64
D_V = 64
MAX_SEQ_LEN = 100           # hp.max_sep_len
LN_EPS = 1e-5               # PyTorch nn.LayerNorm default


def _round_up(x, m):
    return ((x + m - 1) // m) * m


def get_sinusoid_encoding_table(n_position, d_hid, padding_idx=None):
    """Same construction as the original get_sinusoid_encoding_table."""
    pos = np.arange(n_position)[:, None].astype(np.float64)
    i = np.arange(d_hid)[None, :]
    table = pos / np.power(10000.0, 2 * (i // 2) / d_hid)
    table[:, 0::2] = np.sin(table[:, 0::2])
    table[:, 1::2] = np.cos(table[:, 1::2])
    if padding_idx is not None:
        table[padding_idx] = 0.0
    return jnp.asarray(table, dtype=jnp.float32)


# ========================= fully fused DecoderPreNet kernel =========================

def _decoder_prenet_kernel(pos_ref, enc_ref, table_ref,
                           wq_ref, bq_ref, wkv_ref, bkv_ref,
                           wfc_ref, bfc_ref, gamma_ref, beta_ref,
                           o_ref, *, n_head, d_k, d_v, inv_temp, eps,
                           compute_dtype):
    """One grid step = one batch element.  Everything stays in VMEM."""
    cd = compute_dtype
    lq = pos_ref.shape[1]
    n_pos = table_ref.shape[0]

    # ---- positional-embedding lookup as a one-hot matmul (in-kernel gather) ----
    pos_col = pos_ref[0]                                        # (lq, 1) int32
    iota = lax.broadcasted_iota(jnp.int32, (lq, n_pos), 1)      # (lq, n_pos)
    onehot = (iota == pos_col).astype(cd)                       # (lq, n_pos)
    pos_emb = jnp.dot(onehot, table_ref[...].astype(cd),
                      preferred_element_type=jnp.float32)       # (lq, d_model) f32

    # ---- Q projection (from the position embedding) ----
    q = jnp.dot(pos_emb.astype(cd), wq_ref[...].astype(cd),
                preferred_element_type=jnp.float32) + bq_ref[...]   # (lq, H*dk) f32

    # ---- fused K/V projection: single matmul over the encoder activations ----
    enc = enc_ref[0].astype(cd)                                 # (lk, d_model)
    kv = jnp.dot(enc, wkv_ref[...].astype(cd),
                 preferred_element_type=jnp.float32) + bkv_ref[...]  # (lk, 2*H*dk) f32
    k = kv[:, : n_head * d_k]
    v = kv[:, n_head * d_k:]

    # ---- per-head scaled dot-product attention (heads sliced on the lane axis) ----
    ctx_heads = []
    for h in range(n_head):                                     # static unroll (H is tiny)
        qh = q[:, h * d_k:(h + 1) * d_k].astype(cd)             # (lq, dk)
        kh = k[:, h * d_k:(h + 1) * d_k].astype(cd)             # (lk, dk)
        vh = v[:, h * d_v:(h + 1) * d_v].astype(cd)             # (lk, dv)
        # scores = qh @ kh^T, contraction over d_k, f32 accumulation
        s = lax.dot_general(qh, kh, (((1,), (1,)), ((), ())),
                            preferred_element_type=jnp.float32) * inv_temp
        s = s - jnp.max(s, axis=-1, keepdims=True)
        p = jnp.exp(s)
        p = p * pl.reciprocal(jnp.sum(p, axis=-1, keepdims=True), approx=True)
        ctx_heads.append(jnp.dot(p.astype(cd), vh,
                                 preferred_element_type=jnp.float32))
    ctx = jnp.concatenate(ctx_heads, axis=-1)                   # (lq, H*dv) f32

    # ---- fc + dropout(identity in eval) + LayerNorm (all elementwise in f32) ----
    # TODO(synk): training-mode dropout (RNG mask) not implemented.
    h_out = jnp.dot(ctx.astype(cd), wfc_ref[...].astype(cd),
                    preferred_element_type=jnp.float32) + bfc_ref[...]
    mu = jnp.mean(h_out, axis=-1, keepdims=True)
    var = jnp.mean(jnp.square(h_out - mu), axis=-1, keepdims=True)
    hn = (h_out - mu) * lax.rsqrt(var + eps)
    o_ref[0] = (hn * gamma_ref[...] + beta_ref[...]).astype(o_ref.dtype)


# ============================== parameter container ==============================

def init_decoder_prenet_params(key, *, d_model=ENCODER_OUTPUT_SIZE,
                               n_head=DECODER_HEAD, d_k=D_K, d_v=D_V,
                               n_position=MAX_SEQ_LEN + 1):
    """Matches the module's __init__ init distributions.  Projection weights are
    stored pre-transposed as (in_dim, out_dim); K/V weights are pre-concatenated
    so the forward never transposes or concatenates; the sinusoid table is
    zero-padded to a multiple of 128 rows so the in-kernel one-hot is lane-dense."""
    ks = jax.random.split(key, 8)
    std_qk = math.sqrt(2.0 / (d_model + d_k))
    std_v = math.sqrt(2.0 / (d_model + d_v))
    w_q = std_qk * jax.random.normal(ks[0], (d_model, n_head * d_k), jnp.float32)
    w_k = std_qk * jax.random.normal(ks[1], (d_model, n_head * d_k), jnp.float32)
    w_v = std_v * jax.random.normal(ks[2], (d_model, n_head * d_v), jnp.float32)
    bound = 1.0 / math.sqrt(d_model)
    b_q = jax.random.uniform(ks[3], (1, n_head * d_k), jnp.float32, -bound, bound)
    b_k = jax.random.uniform(ks[4], (1, n_head * d_k), jnp.float32, -bound, bound)
    b_v = jax.random.uniform(ks[5], (1, n_head * d_v), jnp.float32, -bound, bound)
    std_fc = math.sqrt(2.0 / (n_head * d_v + d_model))          # xavier_normal_
    w_fc = std_fc * jax.random.normal(ks[6], (n_head * d_v, d_model), jnp.float32)
    bound_fc = 1.0 / math.sqrt(n_head * d_v)
    b_fc = jax.random.uniform(ks[7], (1, d_model), jnp.float32, -bound_fc, bound_fc)

    table = get_sinusoid_encoding_table(n_position, d_model, padding_idx=0)
    n_pos_pad = _round_up(n_position, 128)
    table = jnp.pad(table, ((0, n_pos_pad - n_position), (0, 0)))

    return {
        "w_q": w_q, "b_q": b_q,
        "w_kv": jnp.concatenate([w_k, w_v], axis=1),   # fused K/V weight (d_model, 2*H*dk)
        "b_kv": jnp.concatenate([b_k, b_v], axis=1),
        "w_fc": w_fc, "b_fc": b_fc,
        "ln_gamma": jnp.ones((1, d_model), jnp.float32),
        "ln_beta": jnp.zeros((1, d_model), jnp.float32),
        "pos_table": table,                            # (n_pos_pad, d_model) f32
    }


# ================================ forward wrapper ================================

def decoder_prenet_forward(params, encoder_output, pos, mask=None, *,
                           n_head=DECODER_HEAD, d_k=D_K, d_v=D_V,
                           compute_dtype=jnp.bfloat16):
    """Pallas forward pass of DecoderPreNet (eval mode: dropout = identity).

    encoder_output: (B, Lk, d_model) f32; pos: (B, Lq) int32 position ids.
    The whole module is ONE pallas_call, gridded over batch ("parallel").
    """
    assert mask is None  # TODO(synk): attention-mask path not implemented (module default mask=None)
    b, lq = pos.shape
    _, lk, d_model = encoder_output.shape
    hdk = n_head * d_k
    hdv = n_head * d_v
    n_pos_pad = params["pos_table"].shape[0]
    assert params["w_q"].shape == (d_model, hdk)
    assert d_model % 128 == 0 and hdk % 128 == 0 and hdv % 128 == 0, (
        "pick d_model / n_head*d_k / n_head*d_v as multiples of 128 (lane-dense)")

    # position ids as a (B, Lq, 1) column so the kernel compares them against a
    # lane-axis iota without any in-kernel transpose.
    pos3 = pos.astype(jnp.int32).reshape(b, lq, 1)

    kernel = partial(_decoder_prenet_kernel, n_head=n_head, d_k=d_k, d_v=d_v,
                     inv_temp=1.0 / math.sqrt(d_k), eps=LN_EPS,
                     compute_dtype=compute_dtype)

    return pl.pallas_call(
        kernel,
        out_shape=jax.ShapeDtypeStruct((b, lq, d_model), jnp.float32),
        grid_spec=pltpu.PrefetchScalarGridSpec(
            num_scalar_prefetch=0,
            grid=(b,),
            in_specs=[
                pl.BlockSpec((1, lq, 1), lambda i: (i, 0, 0)),           # pos ids
                pl.BlockSpec((1, lk, d_model), lambda i: (i, 0, 0)),     # encoder output
                pl.BlockSpec((n_pos_pad, d_model), lambda i: (0, 0)),    # sinusoid table
                pl.BlockSpec((d_model, hdk), lambda i: (0, 0)),          # w_q
                pl.BlockSpec((1, hdk), lambda i: (0, 0)),                # b_q
                pl.BlockSpec((d_model, hdk + hdv), lambda i: (0, 0)),    # w_kv (fused)
                pl.BlockSpec((1, hdk + hdv), lambda i: (0, 0)),          # b_kv
                pl.BlockSpec((hdv, d_model), lambda i: (0, 0)),          # w_fc
                pl.BlockSpec((1, d_model), lambda i: (0, 0)),            # b_fc
                pl.BlockSpec((1, d_model), lambda i: (0, 0)),            # ln gamma
                pl.BlockSpec((1, d_model), lambda i: (0, 0)),            # ln beta
            ],
            out_specs=pl.BlockSpec((1, lq, d_model), lambda i: (i, 0, 0)),
        ),
        compiler_params=pltpu.CompilerParams(
            dimension_semantics=("parallel",)),
    )(pos3, encoder_output, params["pos_table"],
      params["w_q"], params["b_q"], params["w_kv"], params["b_kv"],
      params["w_fc"], params["b_fc"], params["ln_gamma"], params["ln_beta"])


# ------------------------ plain-JAX reference (same math) ------------------------

def decoder_prenet_reference(params, encoder_output, pos, *,
                             n_head=DECODER_HEAD, d_k=D_K, d_v=D_V,
                             compute_dtype=jnp.bfloat16):
    cd = compute_dtype
    b, lq = pos.shape
    lk = encoder_output.shape[1]
    hdk = n_head * d_k

    def lin(x, w, bias):
        y = jnp.einsum("bld,dn->bln", x.astype(cd), w.astype(cd),
                       preferred_element_type=jnp.float32)
        return y + bias.astype(jnp.float32)

    pos_emb = jnp.take(params["pos_table"], pos, axis=0)
    q = lin(pos_emb, params["w_q"], params["b_q"])
    kv = lin(encoder_output, params["w_kv"], params["b_kv"])
    k, v = kv[..., :hdk], kv[..., hdk:]
    qh = q.astype(cd).reshape(b, lq, n_head, d_k).transpose(0, 2, 1, 3)
    kh = k.astype(cd).reshape(b, lk, n_head, d_k).transpose(0, 2, 1, 3)
    vh = v.astype(cd).reshape(b, lk, n_head, d_v).transpose(0, 2, 1, 3)
    s = jnp.einsum("bhqd,bhkd->bhqk", qh, kh,
                   preferred_element_type=jnp.float32) / math.sqrt(d_k)
    p = jax.nn.softmax(s, axis=-1)
    ctx = jnp.einsum("bhqk,bhkd->bhqd", p.astype(cd), vh,
                     preferred_element_type=jnp.float32)
    ctx = ctx.transpose(0, 2, 1, 3).reshape(b, lq, n_head * d_v)
    h = jnp.einsum("blk,kn->bln", ctx.astype(cd), params["w_fc"].astype(cd),
                   preferred_element_type=jnp.float32) + params["b_fc"]
    mu = jnp.mean(h, axis=-1, keepdims=True)
    var = jnp.mean(jnp.square(h - mu), axis=-1, keepdims=True)
    hn = (h - mu) * lax.rsqrt(var + LN_EPS)
    return hn * params["ln_gamma"] + params["ln_beta"]


if __name__ == "__main__":
    key = jax.random.PRNGKey(0)
    k_params, k_enc = jax.random.split(key)

    batch, seq = 2, 8
    d_model = ENCODER_OUTPUT_SIZE

    params = init_decoder_prenet_params(k_params)
    encoder_output = jax.random.normal(k_enc, (batch, seq, d_model), jnp.float32)
    pos = jnp.broadcast_to(jnp.arange(1, seq + 1, dtype=jnp.int32), (batch, seq))

    fwd = jax.jit(partial(decoder_prenet_forward, compute_dtype=jnp.bfloat16))
    y = fwd(params, encoder_output, pos)
    jax.block_until_ready(y)

    y_ref = decoder_prenet_reference(params, encoder_output, pos,
                                     compute_dtype=jnp.bfloat16)
    assert y.shape == (batch, seq, d_model)
    assert jnp.allclose(y, y_ref, atol=2e-2, rtol=2e-2), (
        "max abs diff = %f" % float(jnp.max(jnp.abs(y - y_ref))))

    print("KERNEL_OK")
</pallas_src>

<mosaic_0001>
module attributes {stable_mosaic.version = 11 : i64} {
  func.func @_decoder_prenet_kernel(%arg0: i32, %arg1: memref<1x8x1xi32, #tpu.memory_space<vmem>>, %arg2: memref<1x8x128xf32, #tpu.memory_space<vmem>>, %arg3: memref<128x128xf32, #tpu.memory_space<vmem>>, %arg4: memref<128x128xf32, #tpu.memory_space<vmem>>, %arg5: memref<1x128xf32, #tpu.memory_space<vmem>>, %arg6: memref<128x256xf32, #tpu.memory_space<vmem>>, %arg7: memref<1x256xf32, #tpu.memory_space<vmem>>, %arg8: memref<128x128xf32, #tpu.memory_space<vmem>>, %arg9: memref<1x128xf32, #tpu.memory_space<vmem>>, %arg10: memref<1x128xf32, #tpu.memory_space<vmem>>, %arg11: memref<1x128xf32, #tpu.memory_space<vmem>>, %arg12: memref<1x8x128xf32, #tpu.memory_space<vmem>>) attributes {dimension_semantics = [#tpu.dimension_semantics<parallel>], iteration_bounds = array<i64: 2>, scalar_prefetch = 0 : i64, scratch_operands = 0 : i64, tpu.core_type = #tpu.core_type<tc>, window_params = [{transform_indices = @transform_0, window_bounds = array<i64: 1, 8, 1>}, {transform_indices = @transform_1, window_bounds = array<i64: 1, 8, 128>}, {pipeline_mode = #tpu.pipeline_mode<synchronous>, transform_indices = @transform_2, window_bounds = array<i64: 128, 128>}, {pipeline_mode = #tpu.pipeline_mode<synchronous>, transform_indices = @transform_3, window_bounds = array<i64: 128, 128>}, {pipeline_mode = #tpu.pipeline_mode<synchronous>, transform_indices = @transform_4, window_bounds = array<i64: 1, 128>}, {pipeline_mode = #tpu.pipeline_mode<synchronous>, transform_indices = @transform_5, window_bounds = array<i64: 128, 256>}, {pipeline_mode = #tpu.pipeline_mode<synchronous>, transform_indices = @transform_6, window_bounds = array<i64: 1, 256>}, {pipeline_mode = #tpu.pipeline_mode<synchronous>, transform_indices = @transform_7, window_bounds = array<i64: 128, 128>}, {pipeline_mode = #tpu.pipeline_mode<synchronous>, transform_indices = @transform_8, window_bounds = array<i64: 1, 128>}, {pipeline_mode = #tpu.pipeline_mode<synchronous>, transform_indices = @transform_9, window_bounds = array<i64: 1, 128>}, {pipeline_mode = #tpu.pipeline_mode<synchronous>, transform_indices = @transform_10, window_bounds = array<i64: 1, 128>}, {transform_indices = @transform_11, window_bounds = array<i64: 1, 8, 128>}]} {
    %c0 = arith.constant 0 : index
    %c0_0 = arith.constant 0 : index
    %c0_1 = arith.constant 0 : index
    %0 = vector.load %arg1[%c0, %c0_0, %c0_1] : memref<1x8x1xi32, #tpu.memory_space<vmem>>, vector<1x8x1xi32>
    %1 = vector.shape_cast %0 : vector<1x8x1xi32> to vector<8x1xi32>
    %2 = tpu.iota {dimensions = array<i32: 1>} : vector<8x128xi32>
    %3 = vector.broadcast %1 : vector<8x1xi32> to vector<8x128xi32>
    %4 = arith.cmpi eq, %2, %3 : vector<8x128xi32>
    %5 = arith.extui %4 : vector<8x128xi1> to vector<8x128xi32>
    %6 = arith.sitofp %5 : vector<8x128xi32> to vector<8x128xf32>
    %7 = arith.truncf %6 : vector<8x128xf32> to vector<8x128xbf16>
    %c0_2 = arith.constant 0 : index
    %c0_3 = arith.constant 0 : index
    %8 = vector.load %arg3[%c0_2, %c0_3] : memref<128x128xf32, #tpu.memory_space<vmem>>, vector<128x128xf32>
    %9 = arith.truncf %8 : vector<128x128xf32> to vector<128x128xbf16>
    %cst = arith.constant dense<0.000000e+00> : vector<8x128xf32>
    %10 = tpu.matmul %7, %9, %cst {dimension_numbers = #tpu.dot_dimension_numbers<[1], [0], [0], [1], [0, 0, 1, 1], [], []>} : vector<8x128xbf16>, vector<128x128xbf16>, vector<8x128xf32> -> vector<8x128xf32>
    %11 = arith.truncf %10 : vector<8x128xf32> to vector<8x128xbf16>
    %c0_4 = arith.constant 0 : index
    %c0_5 = arith.constant 0 : index
    %12 = vector.load %arg4[%c0_4, %c0_5] : memref<128x128xf32, #tpu.memory_space<vmem>>, vector<128x128xf32>
    %13 = arith.truncf %12 : vector<128x128xf32> to vector<128x128xbf16>
    %cst_6 = arith.constant dense<0.000000e+00> : vector<8x128xf32>
    %14 = tpu.matmul %11, %13, %cst_6 {dimension_numbers = #tpu.dot_dimension_numbers<[1], [0], [0], [1], [0, 0, 1, 1], [], []>} : vector<8x128xbf16>, vector<128x128xbf16>, vector<8x128xf32> -> vector<8x128xf32>
    %c0_7 = arith.constant 0 : index
    %c0_8 = arith.constant 0 : index
    %15 = vector.load %arg5[%c0_7, %c0_8] : memref<1x128xf32, #tpu.memory_space<vmem>>, vector<1x128xf32>
    %16 = vector.broadcast %15 : vector<1x128xf32> to vector<8x128xf32>
    %17 = arith.addf %14, %16 : vector<8x128xf32>
    %c0_9 = arith.constant 0 : index
    %c0_10 = arith.constant 0 : index
    %c0_11 = arith.constant 0 : index
    %18 = vector.load %arg2[%c0_9, %c0_10, %c0_11] : memref<1x8x128xf32, #tpu.memory_space<vmem>>, vector<1x8x128xf32>
    %19 = vector.shape_cast %18 : vector<1x8x128xf32> to vector<8x128xf32>
    %20 = arith.truncf %19 : vector<8x128xf32> to vector<8x128xbf16>
    %c0_12 = arith.constant 0 : index
    %c0_13 = arith.constant 0 : index
    %21 = vector.load %arg6[%c0_12, %c0_13] : memref<128x256xf32, #tpu.memory_space<vmem>>, vector<128x256xf32>
    %22 = arith.truncf %21 : vector<128x256xf32> to vector<128x256xbf16>
    %cst_14 = arith.constant dense<0.000000e+00> : vector<8x256xf32>
    %23 = tpu.matmul %20, %22, %cst_14 {dimension_numbers = #tpu.dot_dimension_numbers<[1], [0], [0], [1], [0, 0, 1, 1], [], []>} : vector<8x128xbf16>, vector<128x256xbf16>, vector<8x256xf32> -> vector<8x256xf32>
    %c0_15 = arith.constant 0 : index
    %c0_16 = arith.constant 0 : index
    %24 = vector.load %arg7[%c0_15, %c0_16] : memref<1x256xf32, #tpu.memory_space<vmem>>, vector<1x256xf32>
    %25 = vector.broadcast %24 : vector<1x256xf32> to vector<8x256xf32>
    %26 = arith.addf %23, %25 : vector<8x256xf32>
    %27 = vector.extract_strided_slice %26 {offsets = [0, 0], sizes = [8, 128], strides = [1, 1]} : vector<8x256xf32> to vector<8x128xf32>
    %28 = vector.extract_strided_slice %26 {offsets = [0, 128], sizes = [8, 128], strides = [1, 1]} : vector<8x256xf32> to vector<8x128xf32>
    %29 = vector.extract_strided_slice %17 {offsets = [0, 0], sizes = [8, 64], strides = [1, 1]} : vector<8x128xf32> to vector<8x64xf32>
    %30 = arith.truncf %29 : vector<8x64xf32> to vector<8x64xbf16>
    %31 = vector.extract_strided_slice %27 {offsets = [0, 0], sizes = [8, 64], strides = [1, 1]} : vector<8x128xf32> to vector<8x64xf32>
    %32 = arith.truncf %31 : vector<8x64xf32> to vector<8x64xbf16>
    %33 = vector.extract_strided_slice %28 {offsets = [0, 0], sizes = [8, 64], strides = [1, 1]} : vector<8x128xf32> to vector<8x64xf32>
    %34 = arith.truncf %33 : vector<8x64xf32> to vector<8x64xbf16>
    %cst_17 = arith.constant dense<0.000000e+00> : vector<8x8xf32>
    %35 = tpu.matmul %30, %32, %cst_17 {dimension_numbers = #tpu.dot_dimension_numbers<[1], [1], [0], [0], [0, 0, 1, 0], [], []>} : vector<8x64xbf16>, vector<8x64xbf16>, vector<8x8xf32> -> vector<8x8xf32>
    %cst_18 = arith.constant 1.250000e-01 : f32
    %36 = vector.broadcast %cst_18 : f32 to vector<8x8xf32>
    %37 = arith.mulf %35, %36 : vector<8x8xf32>
    %cst_19 = arith.constant dense<0xFF800000> : vector<8xf32>
    %38 = vector.multi_reduction <maximumf>, %37, %cst_19 [1] : vector<8x8xf32> to vector<8xf32>
    %39 = vector.shape_cast %38 : vector<8xf32> to vector<8x1xf32>
    %40 = vector.broadcast %39 : vector<8x1xf32> to vector<8x8xf32>
    %41 = arith.subf %37, %40 : vector<8x8xf32>
    %42 = math.exp %41 : vector<8x8xf32>
    %cst_20 = arith.constant dense<0.000000e+00> : vector<8xf32>
    %43 = vector.multi_reduction <add>, %42, %cst_20 [1] : vector<8x8xf32> to vector<8xf32>
    %44 = vector.shape_cast %43 : vector<8xf32> to vector<8x1xf32>
    %45 = tpu.reciprocal %44 {approx = true} : vector<8x1xf32> -> vector<8x1xf32>
    %46 = vector.broadcast %45 : vector<8x1xf32> to vector<8x8xf32>
    %47 = arith.mulf %42, %46 : vector<8x8xf32>
    %48 = arith.truncf %47 : vector<8x8xf32> to vector<8x8xbf16>
    %cst_21 = arith.constant dense<0.000000e+00> : vector<8x64xf32>
    %49 = tpu.matmul %48, %34, %cst_21 {dimension_numbers = #tpu.dot_dimension_numbers<[1], [0], [0], [1], [0, 0, 1, 1], [], []>} : vector<8x8xbf16>, vector<8x64xbf16>, vector<8x64xf32> -> vector<8x64xf32>
    %50 = vector.extract_strided_slice %17 {offsets = [0, 64], sizes = [8, 64], strides = [1, 1]} : vector<8x128xf32> to vector<8x64xf32>
    %51 = arith.truncf %50 : vector<8x64xf32> to vector<8x64xbf16>
    %52 = vector.extract_strided_slice %27 {offsets = [0, 64], sizes = [8, 64], strides = [1, 1]} : vector<8x128xf32> to vector<8x64xf32>
    %53 = arith.truncf %52 : vector<8x64xf32> to vector<8x64xbf16>
    %54 = vector.extract_strided_slice %28 {offsets = [0, 64], sizes = [8, 64], strides = [1, 1]} : vector<8x128xf32> to vector<8x64xf32>
    %55 = arith.truncf %54 : vector<8x64xf32> to vector<8x64xbf16>
    %cst_22 = arith.constant dense<0.000000e+00> : vector<8x8xf32>
    %56 = tpu.matmul %51, %53, %cst_22 {dimension_numbers = #tpu.dot_dimension_numbers<[1], [1], [0], [0], [0, 0, 1, 0], [], []>} : vector<8x64xbf16>, vector<8x64xbf16>, vector<8x8xf32> -> vector<8x8xf32>
    %cst_23 = arith.constant 1.250000e-01 : f32
    %57 = vector.broadcast %cst_23 : f32 to vector<8x8xf32>
    %58 = arith.mulf %56, %57 : vector<8x8xf32>
    %cst_24 = arith.constant dense<0xFF800000> : vector<8xf32>
    %59 = vector.multi_reduction <maximumf>, %58, %cst_24 [1] : vector<8x8xf32> to vector<8xf32>
    %60 = vector.shape_cast %59 : vector<8xf32> to vector<8x1xf32>
    %61 = vector.broadcast %60 : vector<8x1xf32> to vector<8x8xf32>
    %62 = arith.subf %58, %61 : vector<8x8xf32>
    %63 = math.exp %62 : vector<8x8xf32>
    %cst_25 = arith.constant dense<0.000000e+00> : vector<8xf32>
    %64 = vector.multi_reduction <add>, %63, %cst_25 [1] : vector<8x8xf32> to vector<8xf32>
    %65 = vector.shape_cast %64 : vector<8xf32> to vector<8x1xf32>
    %66 = tpu.reciprocal %65 {approx = true} : vector<8x1xf32> -> vector<8x1xf32>
    %67 = vector.broadcast %66 : vector<8x1xf32> to vector<8x8xf32>
    %68 = arith.mulf %63, %67 : vector<8x8xf32>
    %69 = arith.truncf %68 : vector<8x8xf32> to vector<8x8xbf16>
    %cst_26 = arith.constant dense<0.000000e+00> : vector<8x64xf32>
    %70 = tpu.matmul %69, %55, %cst_26 {dimension_numbers = #tpu.dot_dimension_numbers<[1], [0], [0], [1], [0, 0, 1, 1], [], []>} : vector<8x8xbf16>, vector<8x64xbf16>, vector<8x64xf32> -> vector<8x64xf32>
    %71 = tpu.concatenate %49, %70 in 1 : vector<8x64xf32>, vector<8x64xf32> -> vector<8x128xf32>
    %72 = arith.truncf %71 : vector<8x128xf32> to vector<8x128xbf16>
    %c0_27 = arith.constant 0 : index
    %c0_28 = arith.constant 0 : index
    %73 = vector.load %arg8[%c0_27, %c0_28] : memref<128x128xf32, #tpu.memory_space<vmem>>, vector<128x128xf32>
    %74 = arith.truncf %73 : vector<128x128xf32> to vector<128x128xbf16>
    %cst_29 = arith.constant dense<0.000000e+00> : vector<8x128xf32>
    %75 = tpu.matmul %72, %74, %cst_29 {dimension_numbers = #tpu.dot_dimension_numbers<[1], [0], [0], [1], [0, 0, 1, 1], [], []>} : vector<8x128xbf16>, vector<128x128xbf16>, vector<8x128xf32> -> vector<8x128xf32>
    %c0_30 = arith.constant 0 : index
    %c0_31 = arith.constant 0 : index
    %76 = vector.load %arg9[%c0_30, %c0_31] : memref<1x128xf32, #tpu.memory_space<vmem>>, vector<1x128xf32>
    %77 = vector.broadcast %76 : vector<1x128xf32> to vector<8x128xf32>
    %78 = arith.addf %75, %77 : vector<8x128xf32>
    %cst_32 = arith.constant dense<0.000000e+00> : vector<8xf32>
    %79 = vector.multi_reduction <add>, %78, %cst_32 [1] : vector<8x128xf32> to vector<8xf32>
    %80 = vector.shape_cast %79 : vector<8xf32> to vector<8x1xf32>
    %cst_33 = arith.constant 1.280000e+02 : f32
    %81 = vector.broadcast %cst_33 : f32 to vector<8x1xf32>
    %82 = arith.divf %80, %81 : vector<8x1xf32>
    %83 = vector.broadcast %82 : vector<8x1xf32> to vector<8x128xf32>
    %84 = arith.subf %78, %83 : vector<8x128xf32>
    %85 = arith.mulf %84, %84 : vector<8x128xf32>
    %cst_34 = arith.constant dense<0.000000e+00> : vector<8xf32>
    %86 = vector.multi_reduction <add>, %85, %cst_34 [1] : vector<8x128xf32> to vector<8xf32>
    %87 = vector.shape_cast %86 : vector<8xf32> to vector<8x1xf32>
    %cst_35 = arith.constant 1.280000e+02 : f32
    %88 = vector.broadcast %cst_35 : f32 to vector<8x1xf32>
    %89 = arith.divf %87, %88 : vector<8x1xf32>
    %90 = vector.broadcast %82 : vector<8x1xf32> to vector<8x128xf32>
    %91 = arith.subf %78, %90 : vector<8x128xf32>
    %cst_36 = arith.constant 9.99999974E-6 : f32
    %92 = vector.broadcast %cst_36 : f32 to vector<8x1xf32>
    %93 = arith.addf %89, %92 : vector<8x1xf32>
    %94 = math.rsqrt %93 : vector<8x1xf32>
    %95 = vector.broadcast %94 : vector<8x1xf32> to vector<8x128xf32>
    %96 = arith.mulf %91, %95 : vector<8x128xf32>
    %c0_37 = arith.constant 0 : index
    %c0_38 = arith.constant 0 : index
    %97 = vector.load %arg10[%c0_37, %c0_38] : memref<1x128xf32, #tpu.memory_space<vmem>>, vector<1x128xf32>
    %98 = vector.broadcast %97 : vector<1x128xf32> to vector<8x128xf32>
    %99 = arith.mulf %96, %98 : vector<8x128xf32>
    %c0_39 = arith.constant 0 : index
    %c0_40 = arith.constant 0 : index
    %100 = vector.load %arg11[%c0_39, %c0_40] : memref<1x128xf32, #tpu.memory_space<vmem>>, vector<1x128xf32>
    %101 = vector.broadcast %100 : vector<1x128xf32> to vector<8x128xf32>
    %102 = arith.addf %99, %101 : vector<8x128xf32>
    %c0_41 = arith.constant 0 : index
    %c0_42 = arith.constant 0 : index
    %c0_43 = arith.constant 0 : index
    %103 = vector.load %arg12[%c0_41, %c0_42, %c0_43] : memref<1x8x128xf32, #tpu.memory_space<vmem>>, vector<1x8x128xf32>
    %104 = vector.shape_cast %103 : vector<1x8x128xf32> to vector<8x128xf32>
    %105 = vector.shape_cast %102 : vector<8x128xf32> to vector<1x8x128xf32>
    tpu.vector_store %arg12[%c0_41, %c0_42, %c0_43], %105 {strides = array<i32>} : memref<1x8x128xf32, #tpu.memory_space<vmem>>, vector<1x8x128xf32>,
    return
  }
  func.func @transform_0(%arg0: i32) -> (i32, i32, i32) {
    %c0_i32 = arith.constant 0 : i32
    %c0_i32_0 = arith.constant 0 : i32
    %c0_i32_1 = arith.constant 0 : i32
    return %arg0, %c0_i32, %c0_i32_0 : i32, i32, i32
  }
  func.func @transform_1(%arg0: i32) -> (i32, i32, i32) {
    %c0_i32 = arith.constant 0 : i32
    %c0_i32_0 = arith.constant 0 : i32
    %c0_i32_1 = arith.constant 0 : i32
    return %arg0, %c0_i32, %c0_i32_0 : i32, i32, i32
  }
  func.func @transform_2(%arg0: i32) -> (i32, i32) {
    %c0_i32 = arith.constant 0 : i32
    %c0_i32_0 = arith.constant 0 : i32
    %c0_i32_1 = arith.constant 0 : i32
    return %c0_i32, %c0_i32_0 : i32, i32
  }
  func.func @transform_3(%arg0: i32) -> (i32, i32) {
    %c0_i32 = arith.constant 0 : i32
    %c0_i32_0 = arith.constant 0 : i32
    %c0_i32_1 = arith.constant 0 : i32
    return %c0_i32, %c0_i32_0 : i32, i32
  }
  func.func @transform_4(%arg0: i32) -> (i32, i32) {
    %c0_i32 = arith.constant 0 : i32
    %c0_i32_0 = arith.constant 0 : i32
    %c0_i32_1 = arith.constant 0 : i32
    return %c0_i32, %c0_i32_0 : i32, i32
  }
  func.func @transform_5(%arg0: i32) -> (i32, i32) {
    %c0_i32 = arith.constant 0 : i32
    %c0_i32_0 = arith.constant 0 : i32
    %c0_i32_1 = arith.constant 0 : i32
    return %c0_i32, %c0_i32_0 : i32, i32
  }
  func.func @transform_6(%arg0: i32) -> (i32, i32) {
    %c0_i32 = arith.constant 0 : i32
    %c0_i32_0 = arith.constant 0 : i32
    %c0_i32_1 = arith.constant 0 : i32
    return %c0_i32, %c0_i32_0 : i32, i32
  }
  func.func @transform_7(%arg0: i32) -> (i32, i32) {
    %c0_i32 = arith.constant 0 : i32
    %c0_i32_0 = arith.constant 0 : i32
    %c0_i32_1 = arith.constant 0 : i32
    return %c0_i32, %c0_i32_0 : i32, i32
  }
  func.func @transform_8(%arg0: i32) -> (i32, i32) {
    %c0_i32 = arith.constant 0 : i32
    %c0_i32_0 = arith.constant 0 : i32
    %c0_i32_1 = arith.constant 0 : i32
    return %c0_i32, %c0_i32_0 : i32, i32
  }
  func.func @transform_9(%arg0: i32) -> (i32, i32) {
    %c0_i32 = arith.constant 0 : i32
    %c0_i32_0 = arith.constant 0 : i32
    %c0_i32_1 = arith.constant 0 : i32
    return %c0_i32, %c0_i32_0 : i32, i32
  }
  func.func @transform_10(%arg0: i32) -> (i32, i32) {
    %c0_i32 = arith.constant 0 : i32
    %c0_i32_0 = arith.constant 0 : i32
    %c0_i32_1 = arith.constant 0 : i32
    return %c0_i32, %c0_i32_0 : i32, i32
  }
  func.func @transform_11(%arg0: i32) -> (i32, i32, i32) {
    %c0_i32 = arith.constant 0 : i32
    %c0_i32_0 = arith.constant 0 : i32
    %c0_i32_1 = arith.constant 0 : i32
    return %arg0, %c0_i32, %c0_i32_0 : i32, i32, i32
  }
}

</mosaic_0001>

<llo_original>
// kernel: decoder_prenet_forward.1
$region0: #{decoder_prenet_forward.1}
  #allocation0 [shape = 'u32[]', space=smem, size = 0x4, offset = 0x4, fixed_abs, tag = 'smem constant byte address 0x4 - core index']
  #allocation1 [shape = 'u32[144,128]{1,0:T(1,128)}', space=vmem, size = 0x12000, scoped, tag = 'internal scratch']
  %s0 = inlined_call_operand.vmem [shape: s32[2,8,1], index: 0, kind: input, shape index: {}]
  %s1 = inlined_call_operand.vmem [shape: f32[2,8,128], index: 1, kind: input, shape index: {}]
  %s2 = inlined_call_operand.hbm [shape: f32[128,128], index: 2, kind: input, shape index: {}]
  %s3 = inlined_call_operand.hbm [shape: f32[128,128], index: 3, kind: input, shape index: {}]
  %s4 = inlined_call_operand.vmem [shape: f32[1,128], index: 4, kind: input, shape index: {}]
  %s5 = inlined_call_operand.hbm [shape: f32[128,256], index: 5, kind: input, shape index: {}]
  %s6 = inlined_call_operand.vmem [shape: f32[1,256], index: 6, kind: input, shape index: {}]
  %s7 = inlined_call_operand.hbm [shape: f32[128,128], index: 7, kind: input, shape index: {}]
  %s8 = inlined_call_operand.vmem [shape: f32[1,128], index: 8, kind: input, shape index: {}]
  %s9 = inlined_call_operand.vmem [shape: f32[1,128], index: 9, kind: input, shape index: {}]
  %s10 = inlined_call_operand.vmem [shape: f32[1,128], index: 10, kind: input, shape index: {}]
  %s11 = inlined_call_operand.hbm [shape: f32[2,8,128], index: 11, kind: output, shape index: {}]
  %s12 = sld [smem:[#allocation0]]
  $region93: #{decoder_prenet_forward.1} parent=0
    _
  %s14 = ssub.s32 1, %s12
  %s15 = scalar_select 0, %s14, %s12
  $region1: #{decoder_prenet_forward.1} parent=0
    #allocation2 [shape = 'u8[65536]{0}', space=vmem, size = 0x10000, scoped, tag = 'input window, operand 2, single buffered']
    #allocation3 [shape = 's32[2]{0}', space=sflag, size = 0x8, scoped, tag = 'scoped memory for decoder_prenet_forward.1']
    #allocation4 [shape = 's32[2]{0}', space=sflag, size = 0x8, scoped, tag = 'scoped memory for decoder_prenet_forward.1']
    #allocation5 [shape = 'u8[65536]{0}', space=vmem, size = 0x10000, scoped, tag = 'input window, operand 3, single buffered']
    #allocation6 [shape = 's32[1]{0}', space=sflag, size = 0x4, scoped, tag = 'scoped memory for decoder_prenet_forward.1']
    #allocation7 [shape = 'u8[131072]{0}', space=vmem, size = 0x20000, scoped, tag = 'input window, operand 5, single buffered']
    #allocation8 [shape = 'u8[65536]{0}', space=vmem, size = 0x10000, scoped, tag = 'input window, operand 7, single buffered']
    #allocation9 [shape = 's32[1]{0}', space=sflag, size = 0x4, scoped, tag = 'scoped memory for decoder_prenet_forward.1']
    #allocation10 [shape = 'u8[8192]{0}', space=vmem, size = 0x2000, scoped, tag = 'output window, operand 0']
    %16 = vsyncpa [#allocation3], 0
    %17 = vsyncpa [#allocation6], 0
    %18 = vsyncpa [#allocation9], 0
    %19 = vsyncpa [#allocation4], 0
    %s20 = scalar_lea.sflag [#allocation4], 1
    %21 = vsyncpa %s20, 0
    loop: start=0, step=1, limit=4
    $region2: #{decoder_prenet_forward.1} parent=1 // loop_pre_header
      _
    $region3: #{decoder_prenet_forward.1} parent=1 // loop_header
      %s23 = sphi 0, %s27
      %p24 = scmp.ge.s32.totalorder %s23, 4
      %s33 = sphi 0, %s35
      %s36 = sphi 0, %s33
      %s37 = sphi 0, %s36
      %s53 = sphi 0, %s37
      %s59 = sphi 0, %s61
      %s62 = sphi 0, %s59
      %s63 = sphi 0, %s62
      %s79 = sphi 0, %s63
      %s83 = sphi 0, %s83
      %s85 = sphi 0, %s83
      %s86 = sphi 0, %s85
      %s100 = sphi 0, %s86
      %s104 = sphi 0, %s104
      %s106 = sphi 0, %s104
      %s107 = sphi 0, %s106
      %s121 = sphi 0, %s107
      %s125 = sphi 0, %s125
      %s127 = sphi 0, %s125
      %s128 = sphi 0, %s127
      %s142 = sphi 0, %s128
      %s146 = sphi 0, %s146
      %s148 = sphi 0, %s146
      %s149 = sphi 0, %s148
      %s163 = sphi 0, %s149
      %s167 = sphi 0, %s167
      %s169 = sphi 0, %s167
      %s170 = sphi 0, %s169
      %s184 = sphi 0, %s170
      %s188 = sphi 0, %s188
      %s190 = sphi 0, %s188
      %s191 = sphi 0, %s190
      %s205 = sphi 0, %s191
      %s209 = sphi 0, %s209
      %s211 = sphi 0, %s209
      %s212 = sphi 0, %s211
      %s226 = sphi 0, %s212
      %s230 = sphi 0, %s230
      %s232 = sphi 0, %s230
      %s233 = sphi 0, %s232
      %s247 = sphi 0, %s233
      %s251 = sphi 0, %s251
      %s253 = sphi 0, %s251
      %s254 = sphi 0, %s253
      %s268 = sphi 0, %s254
      %s274 = sphi 0, %s276
      %s277 = sphi 0, %s274
      %s278 = sphi 0, %s277
      %s294 = sphi 0, %s278
    $region4: #{decoder_prenet_forward.1} parent=1 // loop_header_branch
      %26 = sbr.rel (%p24) target = $region8
    $region5: #{decoder_prenet_forward.1} parent=1 // loop_body
      %s28 = ssub.s32 %s23, 1
      %s29 = ssub.s32 %s23, 2
      %s30 = sadd.s32 %s23, 1
      %s31 = ssub.s32 %s23, %s30
      %p32 = scmp.eq.s32.totalorder %s31, 0
      %s34 = sadd.s32 %s33, 1
      %s35 = scalar_select %p32, %s33, %s34
      %p38 = pneg %p32
      %p39 = scmp.eq.s32.totalorder %s23, 1
      %p40 = por %p38, %p39
      %p41 = scmp.ne.s32.totalorder %s33, %s36
      %p42 = scmp.eq.s32.totalorder %s23, 0
      %p43 = por %p41, %p42
      %p44 = scmp.ne.s32.totalorder %s33, %s36
      %p45 = scmp.eq.s32.totalorder %s28, 1
      %p46 = por %p44, %p45
      %p47 = scmp.ne.s32.totalorder %s36, %s37
      %p48 = scmp.eq.s32.totalorder %s28, 0
      %p49 = por %p47, %p48
      %p50 = scmp.ne.s32.totalorder %s36, %s37
      %p51 = scmp.eq.s32.totalorder %s29, 1
      %p52 = por %p50, %p51
      %p54 = scmp.ne.s32.totalorder %s37, %s53
      %p55 = scmp.eq.s32.totalorder %s29, 0
      %p56 = por %p54, %p55
      %s57 = ssub.s32 %s23, %s30
      %p58 = scmp.eq.s32.totalorder %s57, 0
      %s60 = sadd.s32 %s59, 1
      %s61 = scalar_select %p58, %s59, %s60
      %p64 = pneg %p58
      %p65 = scmp.eq.s32.totalorder %s23, 1
      %p66 = por %p64, %p65
      %p67 = scmp.ne.s32.totalorder %s59, %s62
      %p68 = scmp.eq.s32.totalorder %s23, 0
      %p69 = por %p67, %p68
      %p70 = scmp.ne.s32.totalorder %s59, %s62
      %p71 = scmp.eq.s32.totalorder %s28, 1
      %p72 = por %p70, %p71
      %p73 = scmp.ne.s32.totalorder %s62, %s63
      %p74 = scmp.eq.s32.totalorder %s28, 0
      %p75 = por %p73, %p74
      %p76 = scmp.ne.s32.totalorder %s62, %s63
      %p77 = scmp.eq.s32.totalorder %s29, 1
      %p78 = por %p76, %p77
      %p80 = scmp.ne.s32.totalorder %s63, %s79
      %p81 = scmp.eq.s32.totalorder %s29, 0
      %p82 = por %p80, %p81
      %s84 = sadd.s32 %s83, 1
      %p87 = scmp.eq.s32.totalorder %s23, 1
      %p88 = scmp.ne.s32.totalorder %s83, %s85
      %p89 = scmp.eq.s32.totalorder %s23, 0
      %p90 = por %p88, %p89
      %p91 = scmp.ne.s32.totalorder %s83, %s85
      %p92 = scmp.eq.s32.totalorder %s28, 1
      %p93 = por %p91, %p92
      %p94 = scmp.ne.s32.totalorder %s85, %s86
      %p95 = scmp.eq.s32.totalorder %s28, 0
      %p96 = por %p94, %p95
      %p97 = scmp.ne.s32.totalorder %s85, %s86
      %p98 = scmp.eq.s32.totalorder %s29, 1
      %p99 = por %p97, %p98
      %p101 = scmp.ne.s32.totalorder %s86, %s100
      %p102 = scmp.eq.s32.totalorder %s29, 0
      %p103 = por %p101, %p102
      %s105 = sadd.s32 %s104, 1
      %p108 = scmp.eq.s32.totalorder %s23, 1
      %p109 = scmp.ne.s32.totalorder %s104, %s106
      %p110 = scmp.eq.s32.totalorder %s23, 0
      %p111 = por %p109, %p110
      %p112 = scmp.ne.s32.totalorder %s104, %s106
      %p113 = scmp.eq.s32.totalorder %s28, 1
      %p114 = por %p112, %p113
      %p115 = scmp.ne.s32.totalorder %s106, %s107
      %p116 = scmp.eq.s32.totalorder %s28, 0
      %p117 = por %p115, %p116
      %p118 = scmp.ne.s32.totalorder %s106, %s107
      %p119 = scmp.eq.s32.totalorder %s29, 1
      %p120 = por %p118, %p119
      %p122 = scmp.ne.s32.totalorder %s107, %s121
      %p123 = scmp.eq.s32.totalorder %s29, 0
      %p124 = por %p122, %p123
      %s126 = sadd.s32 %s125, 1
      %p129 = scmp.eq.s32.totalorder %s23, 1
      %p130 = scmp.ne.s32.totalorder %s125, %s127
      %p131 = scmp.eq.s32.totalorder %s23, 0
      %p132 = por %p130, %p131
      %p133 = scmp.ne.s32.totalorder %s125, %s127
      %p134 = scmp.eq.s32.totalorder %s28, 1
      %p135 = por %p133, %p134
      %p136 = scmp.ne.s32.totalorder %s127, %s128
      %p137 = scmp.eq.s32.totalorder %s28, 0
      %p138 = por %p136, %p137
      %p139 = scmp.ne.s32.totalorder %s127, %s128
      %p140 = scmp.eq.s32.totalorder %s29, 1
      %p141 = por %p139, %p140
      %p143 = scmp.ne.s32.totalorder %s128, %s142
      %p144 = scmp.eq.s32.totalorder %s29, 0
      %p145 = por %p143, %p144
      %s147 = sadd.s32 %s146, 1
      %p150 = scmp.eq.s32.totalorder %s23, 1
      %p151 = scmp.ne.s32.totalorder %s146, %s148
      %p152 = scmp.eq.s32.totalorder %s23, 0
      %p153 = por %p151, %p152
      %p154 = scmp.ne.s32.totalorder %s146, %s148
      %p155 = scmp.eq.s32.totalorder %s28, 1
      %p156 = por %p154, %p155
      %p157 = scmp.ne.s32.totalorder %s148, %s149
      %p158 = scmp.eq.s32.totalorder %s28, 0
      %p159 = por %p157, %p158
      %p160 = scmp.ne.s32.totalorder %s148, %s149
      %p161 = scmp.eq.s32.totalorder %s29, 1
      %p162 = por %p160, %p161
      %p164 = scmp.ne.s32.totalorder %s149, %s163
      %p165 = scmp.eq.s32.totalorder %s29, 0
      %p166 = por %p164, %p165
      %s168 = sadd.s32 %s167, 1
      %p171 = scmp.eq.s32.totalorder %s23, 1
      %p172 = scmp.ne.s32.totalorder %s167, %s169
      %p173 = scmp.eq.s32.totalorder %s23, 0
      %p174 = por %p172, %p173
      %p175 = scmp.ne.s32.totalorder %s167, %s169
      %p176 = scmp.eq.s32.totalorder %s28, 1
      %p177 = por %p175, %p176
      %p178 = scmp.ne.s32.totalorder %s169, %s170
      %p179 = scmp.eq.s32.totalorder %s28, 0
      %p180 = por %p178, %p179
      %p181 = scmp.ne.s32.totalorder %s169, %s170
      %p182 = scmp.eq.s32.totalorder %s29, 1
      %p183 = por %p181, %p182
      %p185 = scmp.ne.s32.totalorder %s170, %s184
      %p186 = scmp.eq.s32.totalorder %s29, 0
      %p187 = por %p185, %p186
      %s189 = sadd.s32 %s188, 1
      %p192 = scmp.eq.s32.totalorder %s23, 1
      %p193 = scmp.ne.s32.totalorder %s188, %s190
      %p194 = scmp.eq.s32.totalorder %s23, 0
      %p195 = por %p193, %p194
      %p196 = scmp.ne.s32.totalorder %s188, %s190
      %p197 = scmp.eq.s32.totalorder %s28, 1
      %p198 = por %p196, %p197
      %p199 = scmp.ne.s32.totalorder %s190, %s191
      %p200 = scmp.eq.s32.totalorder %s28, 0
      %p201 = por %p199, %p200
      %p202 = scmp.ne.s32.totalorder %s190, %s191
      %p203 = scmp.eq.s32.totalorder %s29, 1
      %p204 = por %p202, %p203
      %p206 = scmp.ne.s32.totalorder %s191, %s205
      %p207 = scmp.eq.s32.totalorder %s29, 0
      %p208 = por %p206, %p207
      %s210 = sadd.s32 %s209, 1
      %p213 = scmp.eq.s32.totalorder %s23, 1
      %p214 = scmp.ne.s32.totalorder %s209, %s211
      %p215 = scmp.eq.s32.totalorder %s23, 0
      %p216 = por %p214, %p215
      %p217 = scmp.ne.s32.totalorder %s209, %s211
      %p218 = scmp.eq.s32.totalorder %s28, 1
      %p219 = por %p217, %p218
      %p220 = scmp.ne.s32.totalorder %s211, %s212
      %p221 = scmp.eq.s32.totalorder %s28, 0
      %p222 = por %p220, %p221
      %p223 = scmp.ne.s32.totalorder %s211, %s212
      %p224 = scmp.eq.s32.totalorder %s29, 1
      %p225 = por %p223, %p224
      %p227 = scmp.ne.s32.totalorder %s212, %s226
      %p228 = scmp.eq.s32.totalorder %s29, 0
      %p229 = por %p227, %p228
      %s231 = sadd.s32 %s230, 1
      %p234 = scmp.eq.s32.totalorder %s23, 1
      %p235 = scmp.ne.s32.totalorder %s230, %s232
      %p236 = scmp.eq.s32.totalorder %s23, 0
      %p237 = por %p235, %p236
      %p238 = scmp.ne.s32.totalorder %s230, %s232
      %p239 = scmp.eq.s32.totalorder %s28, 1
      %p240 = por %p238, %p239
      %p241 = scmp.ne.s32.totalorder %s232, %s233
      %p242 = scmp.eq.s32.totalorder %s28, 0
      %p243 = por %p241, %p242
      %p244 = scmp.ne.s32.totalorder %s232, %s233
      %p245 = scmp.eq.s32.totalorder %s29, 1
      %p246 = por %p244, %p245
      %p248 = scmp.ne.s32.totalorder %s233, %s247
      %p249 = scmp.eq.s32.totalorder %s29, 0
      %p250 = por %p248, %p249
      %s252 = sadd.s32 %s251, 1
      %p255 = scmp.eq.s32.totalorder %s23, 1
      %p256 = scmp.ne.s32.totalorder %s251, %s253
      %p257 = scmp.eq.s32.totalorder %s23, 0
      %p258 = por %p256, %p257
      %p259 = scmp.ne.s32.totalorder %s251, %s253
      %p260 = scmp.eq.s32.totalorder %s28, 1
      %p261 = por %p259, %p260
      %p262 = scmp.ne.s32.totalorder %s253, %s254
      %p263 = scmp.eq.s32.totalorder %s28, 0
      %p264 = por %p262, %p263
      %p265 = scmp.ne.s32.totalorder %s253, %s254
      %p266 = scmp.eq.s32.totalorder %s29, 1
      %p267 = por %p265, %p266
      %p269 = scmp.ne.s32.totalorder %s254, %s268
      %p270 = scmp.eq.s32.totalorder %s29, 0
      %p271 = por %p269, %p270
      %s272 = ssub.s32 %s23, %s30
      %p273 = scmp.eq.s32.totalorder %s272, 0
      %s275 = sadd.s32 %s274, 1
      %s276 = scalar_select %p273, %s274, %s275
      %p279 = pneg %p273
      %p280 = scmp.eq.s32.totalorder %s23, 1
      %p281 = por %p279, %p280
      %p282 = scmp.ne.s32.totalorder %s274, %s277
      %p283 = scmp.eq.s32.totalorder %s23, 0
      %p284 = por %p282, %p283
      %p285 = scmp.ne.s32.totalorder %s274, %s277
      %p286 = scmp.eq.s32.totalorder %s28, 1
      %p287 = por %p285, %p286
      %p288 = scmp.ne.s32.totalorder %s277, %s278
      %p289 = scmp.eq.s32.totalorder %s28, 0
      %p290 = por %p288, %p289
      %p291 = scmp.ne.s32.totalorder %s277, %s278
      %p292 = scmp.eq.s32.totalorder %s29, 1
      %p293 = por %p291, %p292
      %p295 = scmp.ne.s32.totalorder %s278, %s294
      %p296 = scmp.eq.s32.totalorder %s29, 0
      %p297 = por %p295, %p296
      %p298 = scmp.le.s32.totalorder 1, %s23
      %p299 = scmp.lt.s32.totalorder %s23, 3
      %p300 = pnand %p298, %p299
      %p301 = pneg %p300
      // Predicated region
      $region9: #{decoder_prenet_forward.1} parent=5 // pred_check
        _
      $region10: #{decoder_prenet_forward.1} parent=5 // pred_check_branch
        %303 = sbr.rel (%p300) target = $region12
      $region11: #{decoder_prenet_forward.1} parent=5 // pred_region
        %s304 = ssub.s32 %s23, 1
        // Predicated region
        $region13: #{decoder_prenet_forward.1} parent=11 // pred_check
          %p305 = pneg %p96
        $region14: #{decoder_prenet_forward.1} parent=11 // pred_check_branch
          %307 = sbr.rel (%p305) target = $region16
        $region15: #{decoder_prenet_forward.1} parent=11 // pred_region
          %s309 = ssub.s32 2048, 2048
          %310 = vsyncadd [#allocation3], %s309
          %s311 = sshll.u32 [#allocation2], 4
          %s312 = int_to_ptr.vmem [resolvable:$true] %s311
          %317 = dma.hbm_to_vmem [thread:$0]  %s2, 2048, %s312, [#allocation3], 128, 128, 8
        $region16: #{decoder_prenet_forward.1} parent=11 // pred_fallthru
          _
        // Predicated region
        $region17: #{decoder_prenet_forward.1} parent=11 // pred_check
          %p318 = pneg %p117
        $region18: #{decoder_prenet_forward.1} parent=11 // pred_check_branch
          %320 = sbr.rel (%p318) target = $region20
        $region19: #{decoder_prenet_forward.1} parent=11 // pred_region
          %s322 = ssub.s32 2048, 2048
          %323 = vsyncadd [#allocation6], %s322
          %s324 = sshll.u32 [#allocation5], 4
          %s325 = int_to_ptr.vmem [resolvable:$true] %s324
          %330 = dma.hbm_to_vmem [thread:$0]  %s3, 2048, %s325, [#allocation6], 128, 128, 8
        $region20: #{decoder_prenet_forward.1} parent=11 // pred_fallthru
          _
        // Predicated region
        $region21: #{decoder_prenet_forward.1} parent=11 // pred_check
          %p331 = pneg %p138
        $region22: #{decoder_prenet_forward.1} parent=11 // pred_check_branch
          %333 = sbr.rel (%p331) target = $region24
        $region23: #{decoder_prenet_forward.1} parent=11 // pred_region
          _
        $region24: #{decoder_prenet_forward.1} parent=11 // pred_fallthru
          _
        // Predicated region
        $region25: #{decoder_prenet_forward.1} parent=11 // pred_check
          %p334 = pneg %p159
        $region26: #{decoder_prenet_forward.1} parent=11 // pred_check_branch
          %336 = sbr.rel (%p334) target = $region28
        $region27: #{decoder_prenet_forward.1} parent=11 // pred_region
          %s338 = ssub.s32 4096, 4096
          %339 = vsyncadd [#allocation6], %s338
          %s340 = sshll.u32 [#allocation7], 4
          %s341 = int_to_ptr.vmem [resolvable:$true] %s340
          %346 = dma.hbm_to_vmem [thread:$0]  %s5, 4096, %s341, [#allocation6], 256, 256, 16
        $region28: #{decoder_prenet_forward.1} parent=11 // pred_fallthru
          _
        // Predicated region
        $region29: #{decoder_prenet_forward.1} parent=11 // pred_check
          %p347 = pneg %p180
        $region30: #{decoder_prenet_forward.1} parent=11 // pred_check_branch
          %349 = sbr.rel (%p347) target = $region32
        $region31: #{decoder_prenet_forward.1} parent=11 // pred_region
          _
        $region32: #{decoder_prenet_forward.1} parent=11 // pred_fallthru
          _
        // Predicated region
        $region33: #{decoder_prenet_forward.1} parent=11 // pred_check
          %p350 = pneg %p201
        $region34: #{decoder_prenet_forward.1} parent=11 // pred_check_branch
          %352 = sbr.rel (%p350) target = $region36
        $region35: #{decoder_prenet_forward.1} parent=11 // pred_region
          %s354 = ssub.s32 2048, 2048
          %355 = vsyncadd [#allocation9], %s354
          %s356 = sshll.u32 [#allocation8], 4
          %s357 = int_to_ptr.vmem [resolvable:$true] %s356
          %362 = dma.hbm_to_vmem [thread:$0]  %s7, 2048, %s357, [#allocation9], 128, 128, 8
        $region36: #{decoder_prenet_forward.1} parent=11 // pred_fallthru
          _
        // Predicated region
        $region37: #{decoder_prenet_forward.1} parent=11 // pred_check
          %p363 = pneg %p222
        $region38: #{decoder_prenet_forward.1} parent=11 // pred_check_branch
          %365 = sbr.rel (%p363) target = $region40
        $region39: #{decoder_prenet_forward.1} parent=11 // pred_region
          _
        $region40: #{decoder_prenet_forward.1} parent=11 // pred_fallthru
          _
        // Predicated region
        $region41: #{decoder_prenet_forward.1} parent=11 // pred_check
          %p366 = pneg %p243
        $region42: #{decoder_prenet_forward.1} parent=11 // pred_check_branch
          %368 = sbr.rel (%p366) target = $region44
        $region43: #{decoder_prenet_forward.1} parent=11 // pred_region
          _
        $region44: #{decoder_prenet_forward.1} parent=11 // pred_fallthru
          _
        // Predicated region
        $region45: #{decoder_prenet_forward.1} parent=11 // pred_check
          %p369 = pneg %p264
        $region46: #{decoder_prenet_forward.1} parent=11 // pred_check_branch
          %371 = sbr.rel (%p369) target = $region48
        $region47: #{decoder_prenet_forward.1} parent=11 // pred_region
          _
        $region48: #{decoder_prenet_forward.1} parent=11 // pred_fallthru
          _
      $region12: #{decoder_prenet_forward.1} parent=5 // pred_fallthru
        _
      %p372 = scmp.lt.s32.totalorder %s23, 2
      // Predicated region
      $region49: #{decoder_prenet_forward.1} parent=5 // pred_check
        %p373 = pneg %p372
      $region50: #{decoder_prenet_forward.1} parent=5 // pred_check_branch
        %375 = sbr.rel (%p373) target = $region52
      $region51: #{decoder_prenet_forward.1} parent=5 // pred_region
        // Predicated region
        $region53: #{decoder_prenet_forward.1} parent=51 // pred_check
          %p376 = pneg %p43
        $region54: #{decoder_prenet_forward.1} parent=51 // pred_check_branch
          %378 = sbr.rel (%p376) target = $region56
        $region55: #{decoder_prenet_forward.1} parent=51 // pred_region
          %p379 = scmp.lt.s32.totalorder %s23, 1
          %s380 = scalar_select %p379, %s23, 1
          %s381 = smul.addr %s380, 8
          %s382 = scalar_lea.vmem %s0, %s381
        $region56: #{decoder_prenet_forward.1} parent=51 // pred_fallthru
          _
        // Predicated region
        $region57: #{decoder_prenet_forward.1} parent=51 // pred_check
          %p383 = pneg %p69
        $region58: #{decoder_prenet_forward.1} parent=51 // pred_check_branch
          %385 = sbr.rel (%p383) target = $region60
        $region59: #{decoder_prenet_forward.1} parent=51 // pred_region
          %p386 = scmp.lt.s32.totalorder %s23, 1
          %s387 = scalar_select %p386, %s23, 1
          %s388 = smul.addr %s387, 8
          %s389 = scalar_lea.vmem %s1, %s388
        $region60: #{decoder_prenet_forward.1} parent=51 // pred_fallthru
          _
      $region52: #{decoder_prenet_forward.1} parent=5 // pred_fallthru
        _
      %p390 = scmp.le.s32.totalorder 1, %s23
      %p391 = scmp.lt.s32.totalorder %s23, 3
      %p392 = pnand %p390, %p391
      %p393 = pneg %p392
      // Predicated region
      $region61: #{decoder_prenet_forward.1} parent=5 // pred_check
        _
      $region62: #{decoder_prenet_forward.1} parent=5 // pred_check_branch
        %395 = sbr.rel (%p392) target = $region64
      $region63: #{decoder_prenet_forward.1} parent=5 // pred_region
        %s396 = ssub.s32 %s23, 1
        // Predicated region
        $region65: #{decoder_prenet_forward.1} parent=63 // pred_check
          %p397 = pneg %p96
        $region66: #{decoder_prenet_forward.1} parent=63 // pred_check_branch
          %399 = sbr.rel (%p397) target = $region68
        $region67: #{decoder_prenet_forward.1} parent=63 // pred_region
          %400 = dma.done [#allocation3], 2048
        $region68: #{decoder_prenet_forward.1} parent=63 // pred_fallthru
          _
        // Predicated region
        $region69: #{decoder_prenet_forward.1} parent=63 // pred_check
          %p401 = pneg %p117
        $region70: #{decoder_prenet_forward.1} parent=63 // pred_check_branch
          %403 = sbr.rel (%p401) target = $region72
        $region71: #{decoder_prenet_forward.1} parent=63 // pred_region
          %404 = dma.done [#allocation6], 2048
        $region72: #{decoder_prenet_forward.1} parent=63 // pred_fallthru
          _
        // Predicated region
        $region73: #{decoder_prenet_forward.1} parent=63 // pred_check
          %p405 = pneg %p159
        $region74: #{decoder_prenet_forward.1} parent=63 // pred_check_branch
          %407 = sbr.rel (%p405) target = $region76
        $region75: #{decoder_prenet_forward.1} parent=63 // pred_region
          %408 = dma.done [#allocation6], 4096
        $region76: #{decoder_prenet_forward.1} parent=63 // pred_fallthru
          _
        // Predicated region
        $region77: #{decoder_prenet_forward.1} parent=63 // pred_check
          %p409 = pneg %p201
        $region78: #{decoder_prenet_forward.1} parent=63 // pred_check_branch
          %411 = sbr.rel (%p409) target = $region80
        $region79: #{decoder_prenet_forward.1} parent=63 // pred_region
          %412 = dma.done [#allocation9], 2048
        $region80: #{decoder_prenet_forward.1} parent=63 // pred_fallthru
          _
        %p413 = scmp.lt.s32.totalorder %s28, 1
        %s414 = scalar_select %p413, %s28, 1
        %s415 = smul.addr %s414, 8
        %s416 = scalar_lea.vmem %s0, %s415
        %p417 = pneg %p49
        %p418 = pneg %p46
        %p419 = scmp.lt.s32.totalorder %s28, 1
        %s420 = scalar_select %p419, %s28, 1
        %s421 = smul.addr %s420, 8
        %s422 = scalar_lea.vmem %s1, %s421
        %p423 = pneg %p75
        %p424 = pneg %p72
        %p425 = pneg %p96
        %p426 = pneg %p93
        %p427 = pneg %p117
        %p428 = pneg %p114
        %p429 = pneg %p138
        %p430 = pneg %p135
        %p431 = pneg %p159
        %p432 = pneg %p156
        %p433 = pneg %p180
        %p434 = pneg %p177
        %p435 = pneg %p201
        %p436 = pneg %p198
        %p437 = pneg %p222
        %p438 = pneg %p219
        %p439 = pneg %p243
        %p440 = pneg %p240
        %p441 = pneg %p264
        %p442 = pneg %p261
        %p443 = pneg %p290
        %p444 = pneg %p287
        %s445 = sand.u32 %s277, 1
        %s446 = scalar_lea.sflag [#allocation4], %s445
        %s447 = sand.u32 %s277, 1
        %s448 = smul.addr %s447, 8
        %s449 = scalar_lea.vmem [#allocation10], %s448
        %p450 = scmp.lt.s32.totalorder %s28, 1
        %s451 = scalar_select %p450, %s28, 1
        %s452 = smul.addr %s451, 8
        %s453 = scalar_lea.vmem %s0, %s452
        %p454 = scmp.lt.s32.totalorder %s28, 1
        %s455 = scalar_select %p454, %s28, 1
        %s456 = smul.addr %s455, 8
        %s457 = scalar_lea.vmem %s1, %s456
        %v459 = vld [vmem:[%s453] sm:$0xff]
        %v460 = vlaneseq
        %v461 = vand.u32 %v460, 127
        %462 = vset.pattern.permute.xlu0 0
        %463 = vperm.xlu0 %462, %v459
        %v464 = vpop.permute.xlu0 %463
        %vm465 = vcmp.eq.s32.totalorder %v461, %v464
        %v466 = vsel %vm465, 1, 0
        %v467 = vcvt.s32.f32 %v466
        %v468 = vpack.c.bf16 %v467, %v467
        %v469 = vld [vmem:[#allocation2] sm:$0xff]
        %v470 = vld [vmem:[#allocation2 + $0x8] sm:$0xff]
        %v471 = vld [vmem:[#allocation2 + $0x10] sm:$0xff]
        %v472 = vld [vmem:[#allocation2 + $0x18] sm:$0xff]
        %v473 = vld [vmem:[#allocation2 + $0x20] sm:$0xff]
        %v474 = vld [vmem:[#allocation2 + $0x28] sm:$0xff]
        %v475 = vld [vmem:[#allocation2 + $0x30] sm:$0xff]
        %v476 = vld [vmem:[#allocation2 + $0x38] sm:$0xff]
        %v477 = vld [vmem:[#allocation2 + $0x40] sm:$0xff]
        %v478 = vld [vmem:[#allocation2 + $0x48] sm:$0xff]
        %v479 = vld [vmem:[#allocation2 + $0x50] sm:$0xff]
        %v480 = vld [vmem:[#allocation2 + $0x58] sm:$0xff]
        %v481 = vld [vmem:[#allocation2 + $0x60] sm:$0xff]
        %v482 = vld [vmem:[#allocation2 + $0x68] sm:$0xff]
        %v483 = vld [vmem:[#allocation2 + $0x70] sm:$0xff]
        %v484 = vld [vmem:[#allocation2 + $0x78] sm:$0xff]
        %v485 = vpack.c.bf16 %v470, %v469
        %v486 = vpack.c.bf16 %v472, %v471
        %v487 = vpack.c.bf16 %v474, %v473
        %v488 = vpack.c.bf16 %v476, %v475
        %v489 = vpack.c.bf16 %v478, %v477
        %v490 = vpack.c.bf16 %v480, %v479
        %v491 = vpack.c.bf16 %v482, %v481
        %v492 = vpack.c.bf16 %v484, %v483
        %493 = vmatprep.subr.bf16.mxu0 0
        %494 = vmatpush1.bf16.msra.mxu0 %v485
        %495 = vmatprep.subr.bf16.mxu0 0
        %496 = vmatpush1.bf16.msra.mxu0 %v486
        %497 = vmatprep.subr.bf16.mxu0 0
        %498 = vmatpush1.bf16.msra.mxu0 %v487
        %499 = vmatprep.subr.bf16.mxu0 0
        %500 = vmatpush1.bf16.msra.mxu0 %v488
        %501 = vmatprep.subr.bf16.mxu0 0
        %502 = vmatpush1.bf16.msra.mxu0 %v489
        %503 = vmatprep.subr.bf16.mxu0 0
        %504 = vmatpush1.bf16.msra.mxu0 %v490
        %505 = vmatprep.subr.bf16.mxu0 0
        %506 = vmatpush1.bf16.msra.mxu0 %v491
        %507 = vmatprep.subr.bf16.mxu0 0
        %508 = vmatpush1.bf16.msra.mxu0 %v492
        %509 = vmatprep.subr.bf16.mxu0 0
        %510 = vmatpush1.bf16.msra.mxu0 0
        %511 = vmatprep.subr.bf16.mxu0 0
        %512 = vmatpush1.bf16.msra.mxu0 0
        %513 = vmatprep.subr.bf16.mxu0 0
        %514 = vmatpush1.bf16.msra.mxu0 0
        %515 = vmatprep.subr.bf16.mxu0 0
        %516 = vmatpush1.bf16.msra.mxu0 0
        %517 = vmatprep.subr.bf16.mxu0 0
        %518 = vmatpush1.bf16.msra.mxu0 0
        %519 = vmatprep.subr.bf16.mxu0 0
        %520 = vmatpush1.bf16.msra.mxu0 0
        %521 = vmatprep.subr.bf16.mxu0 0
        %522 = vmatpush1.bf16.msra.mxu0 0
        %523 = vmatprep.subr.bf16.mxu0 0
        %524 = vmatpush1.bf16.msra.mxu0 0
        %525 = vmatprep.mubr.bf16.mxu0 0
        %526 = vmatmul.mubr.bf16.gmra.mrb[0].mxu0 %v468
        %v527 = vpop.f32.mrb[0].mxu0
        %v528 = vadd.f32 0.0, %v527
        %v529 = vpop.f32.mrb[0].mxu0
        %v530 = vpop.f32.mrb[0].mxu0
        %v531 = vpop.f32.mrb[0].mxu0
        %532 = vdwg.mxu0
        %v533 = vpack.c.bf16 %v528, %v528
        %v534 = vld [vmem:[#allocation5] sm:$0xff]
        %v535 = vld [vmem:[#allocation5 + $0x8] sm:$0xff]
        %v536 = vld [vmem:[#allocation5 + $0x10] sm:$0xff]
        %v537 = vld [vmem:[#allocation5 + $0x18] sm:$0xff]
        %v538 = vld [vmem:[#allocation5 + $0x20] sm:$0xff]
        %v539 = vld [vmem:[#allocation5 + $0x28] sm:$0xff]
        %v540 = vld [vmem:[#allocation5 + $0x30] sm:$0xff]
        %v541 = vld [vmem:[#allocation5 + $0x38] sm:$0xff]
        %v542 = vld [vmem:[#allocation5 + $0x40] sm:$0xff]
        %v543 = vld [vmem:[#allocation5 + $0x48] sm:$0xff]
        %v544 = vld [vmem:[#allocation5 + $0x50] sm:$0xff]
        %v545 = vld [vmem:[#allocation5 + $0x58] sm:$0xff]
        %v546 = vld [vmem:[#allocation5 + $0x60] sm:$0xff]
        %v547 = vld [vmem:[#allocation5 + $0x68] sm:$0xff]
        %v548 = vld [vmem:[#allocation5 + $0x70] sm:$0xff]
        %v549 = vld [vmem:[#allocation5 + $0x78] sm:$0xff]
        %v550 = vpack.c.bf16 %v535, %v534
        %v551 = vpack.c.bf16 %v537, %v536
        %v552 = vpack.c.bf16 %v539, %v538
        %v553 = vpack.c.bf16 %v541, %v540
        %v554 = vpack.c.bf16 %v543, %v542
        %v555 = vpack.c.bf16 %v545, %v544
        %v556 = vpack.c.bf16 %v547, %v546
        %v557 = vpack.c.bf16 %v549, %v548
        %v558 = vld [vmem:[%s4] sm:$0x1]
        %v560 = vlaneseq
        %v561 = vshrl.u32 %v560, 7
        %v562 = vsub.s32 0, %v561
        %v563 = vrot.slane %v558, %v562
        %565 = vmatprep.subr.bf16.mxu0 0
        %566 = vmatpush1.bf16.msra.mxu0 %v550
        %567 = vmatprep.subr.bf16.mxu0 0
        %568 = vmatpush1.bf16.msra.mxu0 %v551
        %569 = vmatprep.subr.bf16.mxu0 0
        %570 = vmatpush1.bf16.msra.mxu0 %v552
        %571 = vmatprep.subr.bf16.mxu0 0
        %572 = vmatpush1.bf16.msra.mxu0 %v553
        %573 = vmatprep.subr.bf16.mxu0 0
        %574 = vmatpush1.bf16.msra.mxu0 %v554
        %575 = vmatprep.subr.bf16.mxu0 0
        %576 = vmatpush1.bf16.msra.mxu0 %v555
        %577 = vmatprep.subr.bf16.mxu0 0
        %578 = vmatpush1.bf16.msra.mxu0 %v556
        %579 = vmatprep.subr.bf16.mxu0 0
        %580 = vmatpush1.bf16.msra.mxu0 %v557
        %581 = vmatprep.subr.bf16.mxu0 0
        %582 = vmatpush1.bf16.msra.mxu0 0
        %583 = vmatprep.subr.bf16.mxu0 0
        %584 = vmatpush1.bf16.msra.mxu0 0
        %585 = vmatprep.subr.bf16.mxu0 0
        %586 = vmatpush1.bf16.msra.mxu0 0
        %587 = vmatprep.subr.bf16.mxu0 0
        %588 = vmatpush1.bf16.msra.mxu0 0
        %589 = vmatprep.subr.bf16.mxu0 0
        %590 = vmatpush1.bf16.msra.mxu0 0
        %591 = vmatprep.subr.bf16.mxu0 0
        %592 = vmatpush1.bf16.msra.mxu0 0
        %593 = vmatprep.subr.bf16.mxu0 0
        %594 = vmatpush1.bf16.msra.mxu0 0
        %595 = vmatprep.subr.bf16.mxu0 0
        %596 = vmatpush1.bf16.msra.mxu0 0
        %597 = vmatprep.mubr.bf16.mxu0 0
        %598 = vmatmul.mubr.bf16.gmra.mrb[0].mxu0 %v533
        %v599 = vpop.f32.mrb[0].mxu0
        %v600 = vadd.f32 %v563, %v599
        %v601 = vpop.f32.mrb[0].mxu0
        %v602 = vpop.f32.mrb[0].mxu0
        %v603 = vpop.f32.mrb[0].mxu0
        %604 = vdwg.mxu0
        %v605 = vld [vmem:[%s457] sm:$0xff]
        %v606 = vpack.c.bf16 %v605, %v605
        %v607 = vld [vmem:[#allocation7] sm:$0xff]
        %v608 = vld [vmem:[#allocation7 + $0x8] sm:$0xff]
        %v609 = vld [vmem:[#allocation7 + $0x10] sm:$0xff]
        %v610 = vld [vmem:[#allocation7 + $0x18] sm:$0xff]
        %v611 = vld [vmem:[#allocation7 + $0x20] sm:$0xff]
        %v612 = vld [vmem:[#allocation7 + $0x28] sm:$0xff]
        %v613 = vld [vmem:[#allocation7 + $0x30] sm:$0xff]
        %v614 = vld [vmem:[#allocation7 + $0x38] sm:$0xff]
        %v615 = vld [vmem:[#allocation7 + $0x40] sm:$0xff]
        %v616 = vld [vmem:[#allocation7 + $0x48] sm:$0xff]
        %v617 = vld [vmem:[#allocation7 + $0x50] sm:$0xff]
        %v618 = vld [vmem:[#allocation7 + $0x58] sm:$0xff]
        %v619 = vld [vmem:[#allocation7 + $0x60] sm:$0xff]
        %v620 = vld [vmem:[#allocation7 + $0x68] sm:$0xff]
        %v621 = vld [vmem:[#allocation7 + $0x70] sm:$0xff]
        %v622 = vld [vmem:[#allocation7 + $0x78] sm:$0xff]
        %v623 = vld [vmem:[#allocation7 + $0x80] sm:$0xff]
        %v624 = vld [vmem:[#allocation7 + $0x88] sm:$0xff]
        %v625 = vld [vmem:[#allocation7 + $0x90] sm:$0xff]
        %v626 = vld [vmem:[#allocation7 + $0x98] sm:$0xff]
        %v627 = vld [vmem:[#allocation7 + $0xa0] sm:$0xff]
        %v628 = vld [vmem:[#allocation7 + $0xa8] sm:$0xff]
        %v629 = vld [vmem:[#allocation7 + $0xb0] sm:$0xff]
        %v630 = vld [vmem:[#allocation7 + $0xb8] sm:$0xff]
        %v631 = vld [vmem:[#allocation7 + $0xc0] sm:$0xff]
        %v632 = vld [vmem:[#allocation7 + $0xc8] sm:$0xff]
        %v633 = vld [vmem:[#allocation7 + $0xd0] sm:$0xff]
        %v634 = vld [vmem:[#allocation7 + $0xd8] sm:$0xff]
        %v635 = vld [vmem:[#allocation7 + $0xe0] sm:$0xff]
        %v636 = vld [vmem:[#allocation7 + $0xe8] sm:$0xff]
        %v637 = vld [vmem:[#allocation7 + $0xf0] sm:$0xff]
        %v638 = vld [vmem:[#allocation7 + $0xf8] sm:$0xff]
        %v639 = vpack.c.bf16 %v609, %v607
        %v640 = vpack.c.bf16 %v610, %v608
        %v641 = vpack.c.bf16 %v613, %v611
        %v642 = vpack.c.bf16 %v614, %v612
        %v643 = vpack.c.bf16 %v617, %v615
        %v644 = vpack.c.bf16 %v618, %v616
        %v645 = vpack.c.bf16 %v621, %v619
        %v646 = vpack.c.bf16 %v622, %v620
        %v647 = vpack.c.bf16 %v625, %v623
        %v648 = vpack.c.bf16 %v626, %v624
        %v649 = vpack.c.bf16 %v629, %v627
        %v650 = vpack.c.bf16 %v630, %v628
        %v651 = vpack.c.bf16 %v633, %v631
        %v652 = vpack.c.bf16 %v634, %v632
        %v653 = vpack.c.bf16 %v637, %v635
        %v654 = vpack.c.bf16 %v638, %v636
        %v655 = vld [vmem:[%s6] sm:$0x3]
        %v657 = vlaneseq
        %v658 = vshrl.u32 %v657, 7
        %v659 = vsub.s32 0, %v658
        %v660 = vrot.slane %v655, %v659
        %v661 = vlaneseq
        %v662 = vshrl.u32 %v661, 7
        %v663 = vsub.s32 1, %v662
        %v664 = vrot.slane %v655, %v663
        %667 = vmatprep.subr.bf16.mxu0 %v640
        %668 = vmatpush1.bf16.msra.mxu0 %v639
        %669 = vmatprep.subr.bf16.mxu0 %v642
        %670 = vmatpush1.bf16.msra.mxu0 %v641
        %671 = vmatprep.subr.bf16.mxu0 %v644
        %672 = vmatpush1.bf16.msra.mxu0 %v643
        %673 = vmatprep.subr.bf16.mxu0 %v646
        %674 = vmatpush1.bf16.msra.mxu0 %v645
        %675 = vmatprep.subr.bf16.mxu0 %v648
        %676 = vmatpush1.bf16.msra.mxu0 %v647
        %677 = vmatprep.subr.bf16.mxu0 %v650
        %678 = vmatpush1.bf16.msra.mxu0 %v649
        %679 = vmatprep.subr.bf16.mxu0 %v652
        %680 = vmatpush1.bf16.msra.mxu0 %v651
        %681 = vmatprep.subr.bf16.mxu0 %v654
        %682 = vmatpush1.bf16.msra.mxu0 %v653
        %683 = vmatprep.subr.bf16.mxu0 0
        %684 = vmatpush1.bf16.msra.mxu0 0
        %685 = vmatprep.subr.bf16.mxu0 0
        %686 = vmatpush1.bf16.msra.mxu0 0
        %687 = vmatprep.subr.bf16.mxu0 0
        %688 = vmatpush1.bf16.msra.mxu0 0
        %689 = vmatprep.subr.bf16.mxu0 0
        %690 = vmatpush1.bf16.msra.mxu0 0
        %691 = vmatprep.subr.bf16.mxu0 0
        %692 = vmatpush1.bf16.msra.mxu0 0
        %693 = vmatprep.subr.bf16.mxu0 0
        %694 = vmatpush1.bf16.msra.mxu0 0
        %695 = vmatprep.subr.bf16.mxu0 0
        %696 = vmatpush1.bf16.msra.mxu0 0
        %697 = vmatprep.subr.bf16.mxu0 0
        %698 = vmatpush1.bf16.msra.mxu0 0
        %699 = vmatprep.mubr.bf16.mxu0 0
        %700 = vmatmul.mubr.bf16.gmra.mrb[0].mxu0 %v606
        %v701 = vpop.f32.mrb[0].mxu0
        %v702 = vadd.f32 %v660, %v701
        %v703 = vpop.f32.mrb[0].mxu0
        %v704 = vadd.f32 %v664, %v703
        %v705 = vpop.f32.mrb[0].mxu0
        %v706 = vpop.f32.mrb[0].mxu0
        %707 = vdwg.mxu0
        %v708 = vpack.c.bf16 %v600, %v600
        %v709 = vpack.c.bf16 %v702, %v702
        %v710 = vpack.c.bf16 %v704, %v704
        %vm711 = vcmask 523264
        %v713 = vsel %vm711, %v708, 0
        %v716 = vsel %vm711, %v709, 0
        %718 = vmatprep.subr.bf16.mxu0 0
        %719 = vmatpush1.bf16.xpose.msra.mxu0 %v716
        %720 = vmatprep.subr.bf16.mxu0 0
        %721 = vmatpush1.bf16.xpose.msra.mxu0 0
        %722 = vmatprep.subr.bf16.mxu0 0
        %723 = vmatpush1.bf16.xpose.msra.mxu0 0
        %724 = vmatprep.subr.bf16.mxu0 0
        %725 = vmatpush1.bf16.xpose.msra.mxu0 0
        %726 = vmatprep.subr.bf16.mxu0 0
        %727 = vmatpush1.bf16.xpose.msra.mxu0 0
        %728 = vmatprep.subr.bf16.mxu0 0
        %729 = vmatpush1.bf16.xpose.msra.mxu0 0
        %730 = vmatprep.subr.bf16.mxu0 0
        %731 = vmatpush1.bf16.xpose.msra.mxu0 0
        %732 = vmatprep.subr.bf16.mxu0 0
        %733 = vmatpush1.bf16.xpose.msra.mxu0 0
        %734 = vmatprep.subr.bf16.mxu0 0
        %735 = vmatpush1.bf16.xpose.msra.mxu0 0
        %736 = vmatprep.subr.bf16.mxu0 0
        %737 = vmatpush1.bf16.xpose.msra.mxu0 0
        %738 = vmatprep.subr.bf16.mxu0 0
        %739 = vmatpush1.bf16.xpose.msra.mxu0 0
        %740 = vmatprep.subr.bf16.mxu0 0
        %741 = vmatpush1.bf16.xpose.msra.mxu0 0
        %742 = vmatprep.subr.bf16.mxu0 0
        %743 = vmatpush1.bf16.xpose.msra.mxu0 0
        %744 = vmatprep.subr.bf16.mxu0 0
        %745 = vmatpush1.bf16.xpose.msra.mxu0 0
        %746 = vmatprep.subr.bf16.mxu0 0
        %747 = vmatpush1.bf16.xpose.msra.mxu0 0
        %748 = vmatprep.subr.bf16.mxu0 0
        %749 = vmatpush1.bf16.xpose.msra.mxu0 0
        %750 = vmatprep.mubr.bf16.mxu0 0
        %751 = vmatmul.mubr.bf16.gmra.mrb[0].mxu0 %v713
        %v752 = vpop.f32.mrb[0].mxu0
        %v753 = vadd.f32 0.0, %v752
        %v754 = vpop.f32.mrb[0].mxu0
        %v755 = vpop.f32.mrb[0].mxu0
        %v756 = vpop.f32.mrb[0].mxu0
        %757 = vdwg.mxu0
        %v758 = vmul.f32 %v753, 0.125
        %vm759 = vcmask 64512
        %v760 = vsel %vm759, %v758, -inf
        %761 = vmax.xlane.f32.xlu0 %v760
        %v762 = vpop.xlane.xlu0 %761
        %v763 = vsub.f32 %v758, %v762
        %v764 = vmul.f32 %v763, 1.442695
        %v765 = vpow.pop %v764
        %v766 = vsel %vm759, %v765, 0.0
        %767 = vadd.xlane.f32.xlu0 %v766
        %v768 = vpop.xlane.xlu0 %767
        %v769 = vrcp.pop %v768
        %v770 = vmul.f32 %v765, %v769
        %v771 = vpack.c.bf16 %v770, %v770
        %v773 = vsel %vm759, %v771, 0
        %vm775 = vcmask 1043456
        %v777 = vsel %vm775, %v710, 0
        %779 = vmatprep.subr.bf16.mxu0 0
        %780 = vmatpush1.bf16.msra.mxu0 %v777
        %781 = vmatprep.subr.bf16.mxu0 0
        %782 = vmatpush1.bf16.msra.mxu0 0
        %783 = vmatprep.subr.bf16.mxu0 0
        %784 = vmatpush1.bf16.msra.mxu0 0
        %785 = vmatprep.subr.bf16.mxu0 0
        %786 = vmatpush1.bf16.msra.mxu0 0
        %787 = vmatprep.subr.bf16.mxu0 0
        %788 = vmatpush1.bf16.msra.mxu0 0
        %789 = vmatprep.subr.bf16.mxu0 0
        %790 = vmatpush1.bf16.msra.mxu0 0
        %791 = vmatprep.subr.bf16.mxu0 0
        %792 = vmatpush1.bf16.msra.mxu0 0
        %793 = vmatprep.subr.bf16.mxu0 0
        %794 = vmatpush1.bf16.msra.mxu0 0
        %795 = vmatprep.subr.bf16.mxu0 0
        %796 = vmatpush1.bf16.msra.mxu0 0
        %797 = vmatprep.subr.bf16.mxu0 0
        %798 = vmatpush1.bf16.msra.mxu0 0
        %799 = vmatprep.subr.bf16.mxu0 0
        %800 = vmatpush1.bf16.msra.mxu0 0
        %801 = vmatprep.subr.bf16.mxu0 0
        %802 = vmatpush1.bf16.msra.mxu0 0
        %803 = vmatprep.subr.bf16.mxu0 0
        %804 = vmatpush1.bf16.msra.mxu0 0
        %805 = vmatprep.subr.bf16.mxu0 0
        %806 = vmatpush1.bf16.msra.mxu0 0
        %807 = vmatprep.subr.bf16.mxu0 0
        %808 = vmatpush1.bf16.msra.mxu0 0
        %809 = vmatprep.subr.bf16.mxu0 0
        %810 = vmatpush1.bf16.msra.mxu0 0
        %811 = vmatprep.mubr.bf16.mxu0 0
        %812 = vmatmul.mubr.bf16.gmra.mrb[0].mxu0 %v773
        %v813 = vpop.f32.mrb[0].mxu0
        %v814 = vadd.f32 0.0, %v813
        %v815 = vpop.f32.mrb[0].mxu0
        %v816 = vpop.f32.mrb[0].mxu0
        %v817 = vpop.f32.mrb[0].mxu0
        %818 = vdwg.mxu0
        %820 = vrot.lane.b32.xlu0 %v708, 64
        %v821 = vpop.permute.xlu0 %820
        %823 = vrot.lane.b32.xlu0 %v709, 64
        %v824 = vpop.permute.xlu0 %823
        %v826 = vsel %vm711, %v821, 0
        %v829 = vsel %vm711, %v824, 0
        %831 = vmatprep.subr.bf16.mxu0 0
        %832 = vmatpush1.bf16.xpose.msra.mxu0 %v829
        %833 = vmatprep.subr.bf16.mxu0 0
        %834 = vmatpush1.bf16.xpose.msra.mxu0 0
        %835 = vmatprep.subr.bf16.mxu0 0
        %836 = vmatpush1.bf16.xpose.msra.mxu0 0
        %837 = vmatprep.subr.bf16.mxu0 0
        %838 = vmatpush1.bf16.xpose.msra.mxu0 0
        %839 = vmatprep.subr.bf16.mxu0 0
        %840 = vmatpush1.bf16.xpose.msra.mxu0 0
        %841 = vmatprep.subr.bf16.mxu0 0
        %842 = vmatpush1.bf16.xpose.msra.mxu0 0
        %843 = vmatprep.subr.bf16.mxu0 0
        %844 = vmatpush1.bf16.xpose.msra.mxu0 0
        %845 = vmatprep.subr.bf16.mxu0 0
        %846 = vmatpush1.bf16.xpose.msra.mxu0 0
        %847 = vmatprep.subr.bf16.mxu0 0
        %848 = vmatpush1.bf16.xpose.msra.mxu0 0
        %849 = vmatprep.subr.bf16.mxu0 0
        %850 = vmatpush1.bf16.xpose.msra.mxu0 0
        %851 = vmatprep.subr.bf16.mxu0 0
        %852 = vmatpush1.bf16.xpose.msra.mxu0 0
        %853 = vmatprep.subr.bf16.mxu0 0
        %854 = vmatpush1.bf16.xpose.msra.mxu0 0
        %855 = vmatprep.subr.bf16.mxu0 0
        %856 = vmatpush1.bf16.xpose.msra.mxu0 0
        %857 = vmatprep.subr.bf16.mxu0 0
        %858 = vmatpush1.bf16.xpose.msra.mxu0 0
        %859 = vmatprep.subr.bf16.mxu0 0
        %860 = vmatpush1.bf16.xpose.msra.mxu0 0
        %861 = vmatprep.subr.bf16.mxu0 0
        %862 = vmatpush1.bf16.xpose.msra.mxu0 0
        %863 = vmatprep.mubr.bf16.mxu0 0
        %864 = vmatmul.mubr.bf16.gmra.mrb[0].mxu0 %v826
        %v865 = vpop.f32.mrb[0].mxu0
        %v866 = vadd.f32 0.0, %v865
        %v867 = vpop.f32.mrb[0].mxu0
        %v868 = vpop.f32.mrb[0].mxu0
        %v869 = vpop.f32.mrb[0].mxu0
        %870 = vdwg.mxu0
        %v871 = vmul.f32 %v866, 0.125
        %v872 = vsel %vm759, %v871, -inf
        %873 = vmax.xlane.f32.xlu0 %v872
        %v874 = vpop.xlane.xlu0 %873
        %v875 = vsub.f32 %v871, %v874
        %v876 = vmul.f32 %v875, 1.442695
        %v877 = vpow.pop %v876
        %v878 = vsel %vm759, %v877, 0.0
        %879 = vadd.xlane.f32.xlu0 %v878
        %v880 = vpop.xlane.xlu0 %879
        %v881 = vrcp.pop %v880
        %v882 = vmul.f32 %v877, %v881
        %v883 = vpack.c.bf16 %v882, %v882
        %885 = vrot.lane.b32.xlu0 %v710, 64
        %v886 = vpop.permute.xlu0 %885
        %v888 = vsel %vm759, %v883, 0
        %v891 = vsel %vm775, %v886, 0
        %893 = vmatprep.subr.bf16.mxu0 0
        %894 = vmatpush1.bf16.msra.mxu0 %v891
        %895 = vmatprep.subr.bf16.mxu0 0
        %896 = vmatpush1.bf16.msra.mxu0 0
        %897 = vmatprep.subr.bf16.mxu0 0
        %898 = vmatpush1.bf16.msra.mxu0 0
        %899 = vmatprep.subr.bf16.mxu0 0
        %900 = vmatpush1.bf16.msra.mxu0 0
        %901 = vmatprep.subr.bf16.mxu0 0
        %902 = vmatpush1.bf16.msra.mxu0 0
        %903 = vmatprep.subr.bf16.mxu0 0
        %904 = vmatpush1.bf16.msra.mxu0 0
        %905 = vmatprep.subr.bf16.mxu0 0
        %906 = vmatpush1.bf16.msra.mxu0 0
        %907 = vmatprep.subr.bf16.mxu0 0
        %908 = vmatpush1.bf16.msra.mxu0 0
        %909 = vmatprep.subr.bf16.mxu0 0
        %910 = vmatpush1.bf16.msra.mxu0 0
        %911 = vmatprep.subr.bf16.mxu0 0
        %912 = vmatpush1.bf16.msra.mxu0 0
        %913 = vmatprep.subr.bf16.mxu0 0
        %914 = vmatpush1.bf16.msra.mxu0 0
        %915 = vmatprep.subr.bf16.mxu0 0
        %916 = vmatpush1.bf16.msra.mxu0 0
        %917 = vmatprep.subr.bf16.mxu0 0
        %918 = vmatpush1.bf16.msra.mxu0 0
        %919 = vmatprep.subr.bf16.mxu0 0
        %920 = vmatpush1.bf16.msra.mxu0 0
        %921 = vmatprep.subr.bf16.mxu0 0
        %922 = vmatpush1.bf16.msra.mxu0 0
        %923 = vmatprep.subr.bf16.mxu0 0
        %924 = vmatpush1.bf16.msra.mxu0 0
        %925 = vmatprep.mubr.bf16.mxu0 0
        %926 = vmatmul.mubr.bf16.gmra.mrb[0].mxu0 %v888
        %v927 = vpop.f32.mrb[0].mxu0
        %v928 = vadd.f32 0.0, %v927
        %v929 = vpop.f32.mrb[0].mxu0
        %v930 = vpop.f32.mrb[0].mxu0
        %v931 = vpop.f32.mrb[0].mxu0
        %932 = vdwg.mxu0
        %934 = vrot.lane.b32.xlu0 %v928, 64
        %v935 = vpop.permute.xlu0 %934
        %v937 = vsel %vm711, %v814, %v935
        %v938 = vpack.c.bf16 %v937, %v937
        %v939 = vld [vmem:[#allocation8] sm:$0xff]
        %v940 = vld [vmem:[#allocation8 + $0x8] sm:$0xff]
        %v941 = vld [vmem:[#allocation8 + $0x10] sm:$0xff]
        %v942 = vld [vmem:[#allocation8 + $0x18] sm:$0xff]
        %v943 = vld [vmem:[#allocation8 + $0x20] sm:$0xff]
        %v944 = vld [vmem:[#allocation8 + $0x28] sm:$0xff]
        %v945 = vld [vmem:[#allocation8 + $0x30] sm:$0xff]
        %v946 = vld [vmem:[#allocation8 + $0x38] sm:$0xff]
        %v947 = vld [vmem:[#allocation8 + $0x40] sm:$0xff]
        %v948 = vld [vmem:[#allocation8 + $0x48] sm:$0xff]
        %v949 = vld [vmem:[#allocation8 + $0x50] sm:$0xff]
        %v950 = vld [vmem:[#allocation8 + $0x58] sm:$0xff]
        %v951 = vld [vmem:[#allocation8 + $0x60] sm:$0xff]
        %v952 = vld [vmem:[#allocation8 + $0x68] sm:$0xff]
        %v953 = vld [vmem:[#allocation8 + $0x70] sm:$0xff]
        %v954 = vld [vmem:[#allocation8 + $0x78] sm:$0xff]
        %v955 = vpack.c.bf16 %v940, %v939
        %v956 = vpack.c.bf16 %v942, %v941
        %v957 = vpack.c.bf16 %v944, %v943
        %v958 = vpack.c.bf16 %v946, %v945
        %v959 = vpack.c.bf16 %v948, %v947
        %v960 = vpack.c.bf16 %v950, %v949
        %v961 = vpack.c.bf16 %v952, %v951
        %v962 = vpack.c.bf16 %v954, %v953
        %v963 = vld [vmem:[%s8] sm:$0x1]
        %v965 = vlaneseq
        %v966 = vshrl.u32 %v965, 7
        %v967 = vsub.s32 0, %v966
        %v968 = vrot.slane %v963, %v967
        %970 = vmatprep.subr.bf16.mxu0 0
        %971 = vmatpush1.bf16.msra.mxu0 %v955
        %972 = vmatprep.subr.bf16.mxu0 0
        %973 = vmatpush1.bf16.msra.mxu0 %v956
        %974 = vmatprep.subr.bf16.mxu0 0
        %975 = vmatpush1.bf16.msra.mxu0 %v957
        %976 = vmatprep.subr.bf16.mxu0 0
        %977 = vmatpush1.bf16.msra.mxu0 %v958
        %978 = vmatprep.subr.bf16.mxu0 0
        %979 = vmatpush1.bf16.msra.mxu0 %v959
        %980 = vmatprep.subr.bf16.mxu0 0
        %981 = vmatpush1.bf16.msra.mxu0 %v960
        %982 = vmatprep.subr.bf16.mxu0 0
        %983 = vmatpush1.bf16.msra.mxu0 %v961
        %984 = vmatprep.subr.bf16.mxu0 0
        %985 = vmatpush1.bf16.msra.mxu0 %v962
        %986 = vmatprep.subr.bf16.mxu0 0
        %987 = vmatpush1.bf16.msra.mxu0 0
        %988 = vmatprep.subr.bf16.mxu0 0
        %989 = vmatpush1.bf16.msra.mxu0 0
        %990 = vmatprep.subr.bf16.mxu0 0
        %991 = vmatpush1.bf16.msra.mxu0 0
        %992 = vmatprep.subr.bf16.mxu0 0
        %993 = vmatpush1.bf16.msra.mxu0 0
        %994 = vmatprep.subr.bf16.mxu0 0
        %995 = vmatpush1.bf16.msra.mxu0 0
        %996 = vmatprep.subr.bf16.mxu0 0
        %997 = vmatpush1.bf16.msra.mxu0 0
        %998 = vmatprep.subr.bf16.mxu0 0
        %999 = vmatpush1.bf16.msra.mxu0 0
        %1000 = vmatprep.subr.bf16.mxu0 0
        %1001 = vmatpush1.bf16.msra.mxu0 0
        %1002 = vmatprep.mubr.bf16.mxu0 0
        %1003 = vmatmul.mubr.bf16.gmra.mrb[0].mxu0 %v938
        %v1004 = vpop.f32.mrb[0].mxu0
        %v1005 = vadd.f32 %v968, %v1004
        %v1006 = vpop.f32.mrb[0].mxu0
        %v1007 = vpop.f32.mrb[0].mxu0
        %v1008 = vpop.f32.mrb[0].mxu0
        %1009 = vdwg.mxu0
        %1010 = vadd.xlane.f32.xlu0 %v1005
        %v1011 = vpop.xlane.xlu0 %1010
        %v1012 = vrcp.pop 128.0
        %v1013 = vmul.f32 %v1011, %v1012
        %v1014 = vsub.f32 %v1005, %v1013
        %v1015 = vmul.f32 %v1014, %v1014
        %1016 = vadd.xlane.f32.xlu0 %v1015
        %v1017 = vpop.xlane.xlu0 %1016
        %v1018 = vmul.f32 %v1017, %v1012
        %v1019 = vadd.f32 %v1018, 1e-05
        %v1020 = vrsqrt.pop %v1019
        %v1021 = vmul.f32 %v1014, %v1020
        %v1022 = vld [vmem:[%s9] sm:$0x1]
        %v1024 = vlaneseq
        %v1025 = vshrl.u32 %v1024, 7
        %v1026 = vsub.s32 0, %v1025
        %v1027 = vrot.slane %v1022, %v1026
        %v1029 = vmul.f32 %v1021, %v1027
        %v1030 = vld [vmem:[%s10] sm:$0x1]
        %v1032 = vlaneseq
        %v1033 = vshrl.u32 %v1032, 7
        %v1034 = vsub.s32 0, %v1033
        %v1035 = vrot.slane %v1030, %v1034
        %v1037 = vadd.f32 %v1029, %v1035
        %1038 = vst [vmem:[%s449] sm:$0xff] %v1037
        %s1039 = sand.u32 %s277, 1
        %s1040 = scalar_lea.sflag [#allocation4], %s1039
        %s1041 = sand.u32 %s277, 1
        %s1042 = smul.addr %s1041, 8
        %s1043 = scalar_lea.vmem [#allocation10], %s1042
        // Predicated region
        $region81: #{decoder_prenet_forward.1} parent=63 // pred_check
          %p1044 = pneg %p287
        $region82: #{decoder_prenet_forward.1} parent=63 // pred_check_branch
          %1046 = sbr.rel (%p1044) target = $region84
        $region83: #{decoder_prenet_forward.1} parent=63 // pred_region
          %s1048 = ssub.s32 128, 128
          %1049 = vsyncadd %s1040, %s1048
          %s1050 = smul.addr %s28, 128
          %s1051 = scalar_lea.hbm %s11, %s1050
          %s1053 = sshll.u32 %s1043, 4
          %s1054 = int_to_ptr.vmem [resolvable:$true] %s1053
          %1056 = dma.vmem_to_hbm [thread:$0]  %s1054, 128, %s1051, %s1040
        $region84: #{decoder_prenet_forward.1} parent=63 // pred_fallthru
          _
      $region64: #{decoder_prenet_forward.1} parent=5 // pred_fallthru
        _
      %p1057 = scmp.le.s32.totalorder 2, %s23
      // Predicated region
      $region85: #{decoder_prenet_forward.1} parent=5 // pred_check
        %p1058 = pneg %p1057
      $region86: #{decoder_prenet_forward.1} parent=5 // pred_check_branch
        %1060 = sbr.rel (%p1058) target = $region88
      $region87: #{decoder_prenet_forward.1} parent=5 // pred_region
        %s1061 = ssub.s32 %s23, 2
        // Predicated region
        $region89: #{decoder_prenet_forward.1} parent=87 // pred_check
          %p1062 = pneg %p293
        $region90: #{decoder_prenet_forward.1} parent=87 // pred_check_branch
          %1064 = sbr.rel (%p1062) target = $region92
        $region91: #{decoder_prenet_forward.1} parent=87 // pred_region
          %s1065 = sand.u32 %s278, 1
          %s1066 = scalar_lea.sflag [#allocation4], %s1065
          %s1067 = sand.u32 %s278, 1
          %s1068 = smul.addr %s1067, 8
          %s1069 = scalar_lea.vmem [#allocation10], %s1068
          %1070 = dma.done %s1066, 128
        $region92: #{decoder_prenet_forward.1} parent=87 // pred_fallthru
          _
      $region88: #{decoder_prenet_forward.1} parent=5 // pred_fallthru
        _
    $region6: #{decoder_prenet_forward.1} parent=1 // loop_footer
      %s27 = sadd.s32 1, %s23
    $region7: #{decoder_prenet_forward.1} parent=1 // loop_footer_branch
      %22 = sbr.rel target = $region3
    $region8: #{decoder_prenet_forward.1} parent=1 // loop_exit
      _
    %1071 = vsyncpa [#allocation3], 1
    %s1072 = scalar_lea.sflag [#allocation3], 1
    %1073 = vsyncpa %s1072, 1
    %1074 = vsyncpa [#allocation6], 1
    %1075 = vsyncpa [#allocation9], 1
    %1076 = vsyncpa [#allocation4], 1
    %s1077 = scalar_lea.sflag [#allocation4], 1
    %1078 = vsyncpa %s1077, 1

</llo_original>
